<compile_context>
chip_gen: v6e
topology: v6e:2x2x1
jax: 0.10.0
libtpu: 0.0.40
codegen_flags: <defaults>
</compile_context>

<pallas_src>
import jax
import jax.numpy as jnp
from jax.experimental import pallas as pl
from jax.experimental.pallas import tpu as pltpu


def _layernorm(v, w, b, eps=1e-5):
    mu = jnp.mean(v, axis=-1, keepdims=True)
    var = jnp.mean((v - mu) ** 2, axis=-1, keepdims=True)
    return (v - mu) * jax.lax.rsqrt(var + eps) * w + b


def _make_kernel(T, D, H):
    HD = D // H

    def kernel(x_ref, pos_ref, ln1w_ref, ln1b_ref,
               wqkv_ref, bqkv_ref, wo_ref, bo_ref,
               ln2w_ref, ln2b_ref, wfc_ref, bfc_ref,
               wproj_ref, bproj_ref, out_ref):
        x = x_ref[0]                        # (T, D) f32 — one clip
        h = x + pos_ref[...]                # x + positional_embedding

        # ---- ResidualAttentionBlock: h = h + attn(ln_1(h)) ----
        ln1 = _layernorm(h, ln1w_ref[...], ln1b_ref[...])
        qkv = jnp.dot(ln1.astype(jnp.bfloat16), wqkv_ref[...],
                      preferred_element_type=jnp.float32) + bqkv_ref[...]   # (T, 3D) f32
        qkv = qkv.astype(jnp.bfloat16)
        # Head-batched layout (H, T, HD); softmax scale already folded into wq/bq.
        qh = jnp.stack([qkv[:, i * HD:(i + 1) * HD] for i in range(H)], axis=0)
        kh = jnp.stack([qkv[:, D + i * HD:D + (i + 1) * HD] for i in range(H)], axis=0)
        vh = jnp.stack([qkv[:, 2 * D + i * HD:2 * D + (i + 1) * HD] for i in range(H)], axis=0)

        s = jnp.einsum('hqd,hkd->hqk', qh, kh,
                       preferred_element_type=jnp.float32)                  # (H, T, T) f32
        s = s - jnp.max(s, axis=-1, keepdims=True)
        p = jnp.exp(s)
        p = p * pl.reciprocal(jnp.sum(p, axis=-1, keepdims=True), approx=True)
        ctx = jnp.einsum('hqk,hkd->hqd', p.astype(jnp.bfloat16), vh,
                         preferred_element_type=jnp.float32)                # (H, T, HD) f32
        attn = jnp.concatenate([ctx[i] for i in range(H)], axis=-1)         # (T, D)
        attn = jnp.dot(attn.astype(jnp.bfloat16), wo_ref[...],
                       preferred_element_type=jnp.float32) + bo_ref[...]
        h = h + attn

        # ---- h = h + mlp(ln_2(h)) ----
        ln2 = _layernorm(h, ln2w_ref[...], ln2b_ref[...])
        fc = jnp.dot(ln2.astype(jnp.bfloat16), wfc_ref[...],
                     preferred_element_type=jnp.float32) + bfc_ref[...]
        fc = fc * jax.nn.sigmoid(1.702 * fc)                                # QuickGELU (f32)
        proj = jnp.dot(fc.astype(jnp.bfloat16), wproj_ref[...],
                       preferred_element_type=jnp.float32) + bproj_ref[...]
        h = h + proj

        # ---- outer residual with original x, then mean over frames ----
        out_ref[...] = jnp.mean(h + x, axis=0, keepdims=True)[None]         # (1, 1, D)

    return kernel


def mit_forward(x, params):
    B, T, D = x.shape
    assert D % 64 == 0
    H = D // 64
    HD = D // H
    scale = HD ** -0.5

    # Fuse Q/K/V into one (D, 3D) weight; fold the softmax scale into wq / bq.
    wqkv = jnp.concatenate(
        [params['wq'] * scale, params['wk'], params['wv']], axis=1).astype(jnp.bfloat16)
    bqkv = jnp.concatenate(
        [params['bq'] * scale, params['bk'], params['bv']], axis=1)   # (1, 3D) f32

    args = (
        x,                                   # (B, T, D) f32
        params['pos'],                       # (T, D)    f32
        params['ln1_w'], params['ln1_b'],    # (1, D)    f32
        wqkv, bqkv,                          # (D, 3D) bf16 / (1, 3D) f32
        params['wo'].astype(jnp.bfloat16), params['bo'],
        params['ln2_w'], params['ln2_b'],
        params['w_fc'].astype(jnp.bfloat16), params['b_fc'],
        params['w_proj'].astype(jnp.bfloat16), params['b_proj'],
    )

    def const_spec(a):
        nd = a.ndim
        return pl.BlockSpec(a.shape, lambda b, _nd=nd: (0,) * _nd)

    in_specs = ([pl.BlockSpec((1, T, D), lambda b: (b, 0, 0))]
                + [const_spec(a) for a in args[1:]])

    out = pl.pallas_call(
        _make_kernel(T, D, H),
        out_shape=jax.ShapeDtypeStruct((B, 1, D), jnp.float32),
        grid=(B,),
        in_specs=in_specs,
        out_specs=pl.BlockSpec((1, 1, D), lambda b: (b, 0, 0)),
        compiler_params=pltpu.CompilerParams(
            dimension_semantics=("parallel",),
            vmem_limit_bytes=32 * 1024 * 1024),
    )(*args)
    return out[:, 0, :]


def reference(x, p):
    """Pure-JAX f32 reference of MultiFrameIntegrationTransformer.forward."""
    B, T, D = x.shape
    H = D // 64
    HD = D // H

    def ln(v, w, b):
        mu = v.mean(-1, keepdims=True)
        var = ((v - mu) ** 2).mean(-1, keepdims=True)
        return (v - mu) / jnp.sqrt(var + 1e-5) * w + b

    h = x + p['pos'][None]                                  # (B,T,D)
    l1 = ln(h, p['ln1_w'][0], p['ln1_b'][0])
    q = (l1 @ p['wq'] + p['bq'][0]).reshape(B, T, H, HD).transpose(0, 2, 1, 3) * (HD ** -0.5)
    k = (l1 @ p['wk'] + p['bk'][0]).reshape(B, T, H, HD).transpose(0, 2, 1, 3)
    v = (l1 @ p['wv'] + p['bv'][0]).reshape(B, T, H, HD).transpose(0, 2, 1, 3)
    s = jnp.einsum('bhqd,bhkd->bhqk', q, k)
    pr = jax.nn.softmax(s, axis=-1)
    o = jnp.einsum('bhqk,bhkd->bhqd', pr, v).transpose(0, 2, 1, 3).reshape(B, T, D)
    o = o @ p['wo'] + p['bo'][0]
    h = h + o
    l2 = ln(h, p['ln2_w'][0], p['ln2_b'][0])
    fc = l2 @ p['w_fc'] + p['b_fc'][0]
    fc = fc * jax.nn.sigmoid(1.702 * fc)
    h = h + fc @ p['w_proj'] + p['b_proj'][0]
    final = h + x
    return final.mean(axis=1)


if __name__ == "__main__":
    # Small shapes consistent with the module (default T=5, embed=512; here
    # T=8, D=128 -> 2 heads of 64, batch of 2 clips).
    B, T, D = 2, 8, 128
    key = jax.random.PRNGKey(0)
    ks = jax.random.split(key, 8)
    std = 0.02

    params = {
        'pos':    jax.random.normal(ks[0], (T, D), jnp.float32) * std,  # (1,T,D) param, squeezed
        'ln1_w':  jnp.ones((1, D), jnp.float32),
        'ln1_b':  jnp.zeros((1, D), jnp.float32),
        'wq':     jax.random.normal(ks[1], (D, D), jnp.float32) * std,
        'bq':     jnp.zeros((1, D), jnp.float32),
        'wk':     jax.random.normal(ks[2], (D, D), jnp.float32) * std,
        'bk':     jnp.zeros((1, D), jnp.float32),
        'wv':     jax.random.normal(ks[3], (D, D), jnp.float32) * std,
        'bv':     jnp.zeros((1, D), jnp.float32),
        'wo':     jax.random.normal(ks[4], (D, D), jnp.float32) * std,
        'bo':     jnp.zeros((1, D), jnp.float32),
        'ln2_w':  jnp.ones((1, D), jnp.float32),
        'ln2_b':  jnp.zeros((1, D), jnp.float32),
        'w_fc':   jax.random.normal(ks[5], (D, 4 * D), jnp.float32) * std,
        'b_fc':   jnp.zeros((1, 4 * D), jnp.float32),
        'w_proj': jax.random.normal(ks[6], (4 * D, D), jnp.float32) * std,
        'b_proj': jnp.zeros((1, D), jnp.float32),
    }

    x = jax.random.normal(ks[7], (B, T, D), jnp.float32)

    out = jax.block_until_ready(mit_forward(x, params))
    ref = reference(x, params)

    assert out.shape == (B, D) and out.dtype == jnp.float32
    # bf16 matmul operands (matching the module's mixed-precision autocast) vs f32
    # reference -> tolerance at the bf16 level.
    err = float(jnp.max(jnp.abs(out - ref)))
    assert jnp.allclose(out, ref, atol=2e-2, rtol=2e-2), f"max abs err = {err}"
    print("KERNEL_OK")
</pallas_src>

<mosaic_0001>
module attributes {stable_mosaic.version = 11 : i64} {
  func.func @kernel(%arg0: i32, %arg1: memref<1x8x128xf32, #tpu.memory_space<vmem>>, %arg2: memref<8x128xf32, #tpu.memory_space<vmem>>, %arg3: memref<1x128xf32, #tpu.memory_space<vmem>>, %arg4: memref<1x128xf32, #tpu.memory_space<vmem>>, %arg5: memref<128x384xbf16, #tpu.memory_space<vmem>>, %arg6: memref<1x384xf32, #tpu.memory_space<vmem>>, %arg7: memref<128x128xbf16, #tpu.memory_space<vmem>>, %arg8: memref<1x128xf32, #tpu.memory_space<vmem>>, %arg9: memref<1x128xf32, #tpu.memory_space<vmem>>, %arg10: memref<1x128xf32, #tpu.memory_space<vmem>>, %arg11: memref<128x512xbf16, #tpu.memory_space<vmem>>, %arg12: memref<1x512xf32, #tpu.memory_space<vmem>>, %arg13: memref<512x128xbf16, #tpu.memory_space<vmem>>, %arg14: memref<1x128xf32, #tpu.memory_space<vmem>>, %arg15: memref<1x1x128xf32, #tpu.memory_space<vmem>>) attributes {dimension_semantics = [#tpu.dimension_semantics<parallel>], iteration_bounds = array<i64: 2>, scalar_prefetch = 0 : i64, scratch_operands = 0 : i64, tpu.core_type = #tpu.core_type<tc>, window_params = [{transform_indices = @transform_0, window_bounds = array<i64: 1, 8, 128>}, {pipeline_mode = #tpu.pipeline_mode<synchronous>, transform_indices = @transform_1, window_bounds = array<i64: 8, 128>}, {pipeline_mode = #tpu.pipeline_mode<synchronous>, transform_indices = @transform_2, window_bounds = array<i64: 1, 128>}, {pipeline_mode = #tpu.pipeline_mode<synchronous>, transform_indices = @transform_3, window_bounds = array<i64: 1, 128>}, {pipeline_mode = #tpu.pipeline_mode<synchronous>, transform_indices = @transform_4, window_bounds = array<i64: 128, 384>}, {pipeline_mode = #tpu.pipeline_mode<synchronous>, transform_indices = @transform_5, window_bounds = array<i64: 1, 384>}, {pipeline_mode = #tpu.pipeline_mode<synchronous>, transform_indices = @transform_6, window_bounds = array<i64: 128, 128>}, {pipeline_mode = #tpu.pipeline_mode<synchronous>, transform_indices = @transform_7, window_bounds = array<i64: 1, 128>}, {pipeline_mode = #tpu.pipeline_mode<synchronous>, transform_indices = @transform_8, window_bounds = array<i64: 1, 128>}, {pipeline_mode = #tpu.pipeline_mode<synchronous>, transform_indices = @transform_9, window_bounds = array<i64: 1, 128>}, {pipeline_mode = #tpu.pipeline_mode<synchronous>, transform_indices = @transform_10, window_bounds = array<i64: 128, 512>}, {pipeline_mode = #tpu.pipeline_mode<synchronous>, transform_indices = @transform_11, window_bounds = array<i64: 1, 512>}, {pipeline_mode = #tpu.pipeline_mode<synchronous>, transform_indices = @transform_12, window_bounds = array<i64: 512, 128>}, {pipeline_mode = #tpu.pipeline_mode<synchronous>, transform_indices = @transform_13, window_bounds = array<i64: 1, 128>}, {transform_indices = @transform_14, window_bounds = array<i64: 1, 1, 128>}]} {
    %c0 = arith.constant 0 : index
    %c0_0 = arith.constant 0 : index
    %c0_1 = arith.constant 0 : index
    %0 = vector.load %arg1[%c0, %c0_0, %c0_1] : memref<1x8x128xf32, #tpu.memory_space<vmem>>, vector<1x8x128xf32>
    %1 = vector.shape_cast %0 : vector<1x8x128xf32> to vector<8x128xf32>
    %c0_2 = arith.constant 0 : index
    %c0_3 = arith.constant 0 : index
    %2 = vector.load %arg2[%c0_2, %c0_3] : memref<8x128xf32, #tpu.memory_space<vmem>>, vector<8x128xf32>
    %3 = arith.addf %1, %2 : vector<8x128xf32>
    %c0_4 = arith.constant 0 : index
    %c0_5 = arith.constant 0 : index
    %4 = vector.load %arg3[%c0_4, %c0_5] : memref<1x128xf32, #tpu.memory_space<vmem>>, vector<1x128xf32>
    %c0_6 = arith.constant 0 : index
    %c0_7 = arith.constant 0 : index
    %5 = vector.load %arg4[%c0_6, %c0_7] : memref<1x128xf32, #tpu.memory_space<vmem>>, vector<1x128xf32>
    %cst = arith.constant dense<0.000000e+00> : vector<8xf32>
    %6 = vector.multi_reduction <add>, %3, %cst [1] : vector<8x128xf32> to vector<8xf32>
    %7 = vector.shape_cast %6 : vector<8xf32> to vector<8x1xf32>
    %cst_8 = arith.constant 1.280000e+02 : f32
    %8 = vector.broadcast %cst_8 : f32 to vector<8x1xf32>
    %9 = arith.divf %7, %8 : vector<8x1xf32>
    %10 = vector.broadcast %9 : vector<8x1xf32> to vector<8x128xf32>
    %11 = arith.subf %3, %10 : vector<8x128xf32>
    %12 = arith.mulf %11, %11 : vector<8x128xf32>
    %cst_9 = arith.constant dense<0.000000e+00> : vector<8xf32>
    %13 = vector.multi_reduction <add>, %12, %cst_9 [1] : vector<8x128xf32> to vector<8xf32>
    %14 = vector.shape_cast %13 : vector<8xf32> to vector<8x1xf32>
    %cst_10 = arith.constant 1.280000e+02 : f32
    %15 = vector.broadcast %cst_10 : f32 to vector<8x1xf32>
    %16 = arith.divf %14, %15 : vector<8x1xf32>
    %17 = vector.broadcast %9 : vector<8x1xf32> to vector<8x128xf32>
    %18 = arith.subf %3, %17 : vector<8x128xf32>
    %cst_11 = arith.constant 9.99999974E-6 : f32
    %19 = vector.broadcast %cst_11 : f32 to vector<8x1xf32>
    %20 = arith.addf %16, %19 : vector<8x1xf32>
    %21 = math.rsqrt %20 : vector<8x1xf32>
    %22 = vector.broadcast %21 : vector<8x1xf32> to vector<8x128xf32>
    %23 = arith.mulf %18, %22 : vector<8x128xf32>
    %24 = vector.broadcast %4 : vector<1x128xf32> to vector<8x128xf32>
    %25 = arith.mulf %23, %24 : vector<8x128xf32>
    %26 = vector.broadcast %5 : vector<1x128xf32> to vector<8x128xf32>
    %27 = arith.addf %25, %26 : vector<8x128xf32>
    %28 = arith.truncf %27 : vector<8x128xf32> to vector<8x128xbf16>
    %c0_12 = arith.constant 0 : index
    %c0_13 = arith.constant 0 : index
    %29 = vector.load %arg5[%c0_12, %c0_13] : memref<128x384xbf16, #tpu.memory_space<vmem>>, vector<128x384xbf16>
    %cst_14 = arith.constant dense<0.000000e+00> : vector<8x384xf32>
    %30 = tpu.matmul %28, %29, %cst_14 {dimension_numbers = #tpu.dot_dimension_numbers<[1], [0], [0], [1], [0, 0, 1, 1], [], []>} : vector<8x128xbf16>, vector<128x384xbf16>, vector<8x384xf32> -> vector<8x384xf32>
    %c0_15 = arith.constant 0 : index
    %c0_16 = arith.constant 0 : index
    %31 = vector.load %arg6[%c0_15, %c0_16] : memref<1x384xf32, #tpu.memory_space<vmem>>, vector<1x384xf32>
    %32 = vector.broadcast %31 : vector<1x384xf32> to vector<8x384xf32>
    %33 = arith.addf %30, %32 : vector<8x384xf32>
    %34 = arith.truncf %33 : vector<8x384xf32> to vector<8x384xbf16>
    %35 = vector.extract_strided_slice %34 {offsets = [0, 0], sizes = [8, 64], strides = [1, 1]} : vector<8x384xbf16> to vector<8x64xbf16>
    %36 = vector.extract_strided_slice %34 {offsets = [0, 64], sizes = [8, 64], strides = [1, 1]} : vector<8x384xbf16> to vector<8x64xbf16>
    %37 = vector.shape_cast %35 : vector<8x64xbf16> to vector<1x8x64xbf16>
    %38 = vector.shape_cast %36 : vector<8x64xbf16> to vector<1x8x64xbf16>
    %39 = tpu.concatenate %37, %38 in 0 : vector<1x8x64xbf16>, vector<1x8x64xbf16> -> vector<2x8x64xbf16>
    %40 = vector.extract_strided_slice %34 {offsets = [0, 128], sizes = [8, 64], strides = [1, 1]} : vector<8x384xbf16> to vector<8x64xbf16>
    %41 = vector.extract_strided_slice %34 {offsets = [0, 192], sizes = [8, 64], strides = [1, 1]} : vector<8x384xbf16> to vector<8x64xbf16>
    %42 = vector.shape_cast %40 : vector<8x64xbf16> to vector<1x8x64xbf16>
    %43 = vector.shape_cast %41 : vector<8x64xbf16> to vector<1x8x64xbf16>
    %44 = tpu.concatenate %42, %43 in 0 : vector<1x8x64xbf16>, vector<1x8x64xbf16> -> vector<2x8x64xbf16>
    %45 = vector.extract_strided_slice %34 {offsets = [0, 256], sizes = [8, 64], strides = [1, 1]} : vector<8x384xbf16> to vector<8x64xbf16>
    %46 = vector.extract_strided_slice %34 {offsets = [0, 320], sizes = [8, 64], strides = [1, 1]} : vector<8x384xbf16> to vector<8x64xbf16>
    %47 = vector.shape_cast %45 : vector<8x64xbf16> to vector<1x8x64xbf16>
    %48 = vector.shape_cast %46 : vector<8x64xbf16> to vector<1x8x64xbf16>
    %49 = tpu.concatenate %47, %48 in 0 : vector<1x8x64xbf16>, vector<1x8x64xbf16> -> vector<2x8x64xbf16>
    "tpu.trace_start"() <{level = 10 : i32, message = "hqd,hkd->hqk"}> : () -> ()
    %cst_17 = arith.constant dense<0.000000e+00> : vector<2x8x8xf32>
    %50 = tpu.matmul %39, %44, %cst_17 {dimension_numbers = #tpu.dot_dimension_numbers<[2], [2], [1], [1], [0, 0, 0, 1, 1, 1], [0], [0]>} : vector<2x8x64xbf16>, vector<2x8x64xbf16>, vector<2x8x8xf32> -> vector<2x8x8xf32>
    "tpu.trace_stop"() : () -> ()
    %cst_18 = arith.constant dense<0xFF800000> : vector<2x8xf32>
    %51 = vector.multi_reduction <maximumf>, %50, %cst_18 [2] : vector<2x8x8xf32> to vector<2x8xf32>
    %52 = vector.shape_cast %51 : vector<2x8xf32> to vector<2x8x1xf32>
    %53 = vector.broadcast %52 : vector<2x8x1xf32> to vector<2x8x8xf32>
    %54 = arith.subf %50, %53 : vector<2x8x8xf32>
    %55 = math.exp %54 : vector<2x8x8xf32>
    %cst_19 = arith.constant dense<0.000000e+00> : vector<2x8xf32>
    %56 = vector.multi_reduction <add>, %55, %cst_19 [2] : vector<2x8x8xf32> to vector<2x8xf32>
    %57 = vector.shape_cast %56 : vector<2x8xf32> to vector<2x8x1xf32>
    %58 = tpu.reciprocal %57 {approx = true} : vector<2x8x1xf32> -> vector<2x8x1xf32>
    %59 = vector.broadcast %58 : vector<2x8x1xf32> to vector<2x8x8xf32>
    %60 = arith.mulf %55, %59 : vector<2x8x8xf32>
    %61 = arith.truncf %60 : vector<2x8x8xf32> to vector<2x8x8xbf16>
    "tpu.trace_start"() <{level = 10 : i32, message = "hqk,hkd->hqd"}> : () -> ()
    %cst_20 = arith.constant dense<0.000000e+00> : vector<2x8x64xf32>
    %62 = tpu.matmul %61, %49, %cst_20 {dimension_numbers = #tpu.dot_dimension_numbers<[2], [1], [1], [2], [0, 0, 0, 1, 1, 2], [0], [0]>} : vector<2x8x8xbf16>, vector<2x8x64xbf16>, vector<2x8x64xf32> -> vector<2x8x64xf32>
    "tpu.trace_stop"() : () -> ()
    %63 = vector.extract_strided_slice %62 {offsets = [0, 0, 0], sizes = [1, 8, 64], strides = [1, 1, 1]} : vector<2x8x64xf32> to vector<1x8x64xf32>
    %64 = vector.shape_cast %63 : vector<1x8x64xf32> to vector<8x64xf32>
    %65 = vector.extract_strided_slice %62 {offsets = [1, 0, 0], sizes = [1, 8, 64], strides = [1, 1, 1]} : vector<2x8x64xf32> to vector<1x8x64xf32>
    %66 = vector.shape_cast %65 : vector<1x8x64xf32> to vector<8x64xf32>
    %67 = tpu.concatenate %64, %66 in 1 : vector<8x64xf32>, vector<8x64xf32> -> vector<8x128xf32>
    %68 = arith.truncf %67 : vector<8x128xf32> to vector<8x128xbf16>
    %c0_21 = arith.constant 0 : index
    %c0_22 = arith.constant 0 : index
    %69 = vector.load %arg7[%c0_21, %c0_22] : memref<128x128xbf16, #tpu.memory_space<vmem>>, vector<128x128xbf16>
    %cst_23 = arith.constant dense<0.000000e+00> : vector<8x128xf32>
    %70 = tpu.matmul %68, %69, %cst_23 {dimension_numbers = #tpu.dot_dimension_numbers<[1], [0], [0], [1], [0, 0, 1, 1], [], []>} : vector<8x128xbf16>, vector<128x128xbf16>, vector<8x128xf32> -> vector<8x128xf32>
    %c0_24 = arith.constant 0 : index
    %c0_25 = arith.constant 0 : index
    %71 = vector.load %arg8[%c0_24, %c0_25] : memref<1x128xf32, #tpu.memory_space<vmem>>, vector<1x128xf32>
    %72 = vector.broadcast %71 : vector<1x128xf32> to vector<8x128xf32>
    %73 = arith.addf %70, %72 : vector<8x128xf32>
    %74 = arith.addf %3, %73 : vector<8x128xf32>
    %c0_26 = arith.constant 0 : index
    %c0_27 = arith.constant 0 : index
    %75 = vector.load %arg9[%c0_26, %c0_27] : memref<1x128xf32, #tpu.memory_space<vmem>>, vector<1x128xf32>
    %c0_28 = arith.constant 0 : index
    %c0_29 = arith.constant 0 : index
    %76 = vector.load %arg10[%c0_28, %c0_29] : memref<1x128xf32, #tpu.memory_space<vmem>>, vector<1x128xf32>
    %cst_30 = arith.constant dense<0.000000e+00> : vector<8xf32>
    %77 = vector.multi_reduction <add>, %74, %cst_30 [1] : vector<8x128xf32> to vector<8xf32>
    %78 = vector.shape_cast %77 : vector<8xf32> to vector<8x1xf32>
    %cst_31 = arith.constant 1.280000e+02 : f32
    %79 = vector.broadcast %cst_31 : f32 to vector<8x1xf32>
    %80 = arith.divf %78, %79 : vector<8x1xf32>
    %81 = vector.broadcast %80 : vector<8x1xf32> to vector<8x128xf32>
    %82 = arith.subf %74, %81 : vector<8x128xf32>
    %83 = arith.mulf %82, %82 : vector<8x128xf32>
    %cst_32 = arith.constant dense<0.000000e+00> : vector<8xf32>
    %84 = vector.multi_reduction <add>, %83, %cst_32 [1] : vector<8x128xf32> to vector<8xf32>
    %85 = vector.shape_cast %84 : vector<8xf32> to vector<8x1xf32>
    %cst_33 = arith.constant 1.280000e+02 : f32
    %86 = vector.broadcast %cst_33 : f32 to vector<8x1xf32>
    %87 = arith.divf %85, %86 : vector<8x1xf32>
    %88 = vector.broadcast %80 : vector<8x1xf32> to vector<8x128xf32>
    %89 = arith.subf %74, %88 : vector<8x128xf32>
    %cst_34 = arith.constant 9.99999974E-6 : f32
    %90 = vector.broadcast %cst_34 : f32 to vector<8x1xf32>
    %91 = arith.addf %87, %90 : vector<8x1xf32>
    %92 = math.rsqrt %91 : vector<8x1xf32>
    %93 = vector.broadcast %92 : vector<8x1xf32> to vector<8x128xf32>
    %94 = arith.mulf %89, %93 : vector<8x128xf32>
    %95 = vector.broadcast %75 : vector<1x128xf32> to vector<8x128xf32>
    %96 = arith.mulf %94, %95 : vector<8x128xf32>
    %97 = vector.broadcast %76 : vector<1x128xf32> to vector<8x128xf32>
    %98 = arith.addf %96, %97 : vector<8x128xf32>
    %99 = arith.truncf %98 : vector<8x128xf32> to vector<8x128xbf16>
    %c0_35 = arith.constant 0 : index
    %c0_36 = arith.constant 0 : index
    %100 = vector.load %arg11[%c0_35, %c0_36] : memref<128x512xbf16, #tpu.memory_space<vmem>>, vector<128x512xbf16>
    %cst_37 = arith.constant dense<0.000000e+00> : vector<8x512xf32>
    %101 = tpu.matmul %99, %100, %cst_37 {dimension_numbers = #tpu.dot_dimension_numbers<[1], [0], [0], [1], [0, 0, 1, 1], [], []>} : vector<8x128xbf16>, vector<128x512xbf16>, vector<8x512xf32> -> vector<8x512xf32>
    %c0_38 = arith.constant 0 : index
    %c0_39 = arith.constant 0 : index
    %102 = vector.load %arg12[%c0_38, %c0_39] : memref<1x512xf32, #tpu.memory_space<vmem>>, vector<1x512xf32>
    %103 = vector.broadcast %102 : vector<1x512xf32> to vector<8x512xf32>
    %104 = arith.addf %101, %103 : vector<8x512xf32>
    %cst_40 = arith.constant 1.702000e+00 : f32
    %105 = vector.broadcast %cst_40 : f32 to vector<8x512xf32>
    %106 = arith.mulf %105, %104 : vector<8x512xf32>
    %107 = arith.negf %106 : vector<8x512xf32>
    %108 = math.exp %107 : vector<8x512xf32>
    %cst_41 = arith.constant 1.000000e+00 : f32
    %109 = vector.broadcast %cst_41 : f32 to vector<8x512xf32>
    %110 = arith.addf %109, %108 : vector<8x512xf32>
    %111 = arith.divf %109, %110 : vector<8x512xf32>
    %112 = arith.mulf %104, %111 : vector<8x512xf32>
    %113 = arith.truncf %112 : vector<8x512xf32> to vector<8x512xbf16>
    %c0_42 = arith.constant 0 : index
    %c0_43 = arith.constant 0 : index
    %114 = vector.load %arg13[%c0_42, %c0_43] : memref<512x128xbf16, #tpu.memory_space<vmem>>, vector<512x128xbf16>
    %cst_44 = arith.constant dense<0.000000e+00> : vector<8x128xf32>
    %115 = tpu.matmul %113, %114, %cst_44 {dimension_numbers = #tpu.dot_dimension_numbers<[1], [0], [0], [1], [0, 0, 1, 1], [], []>} : vector<8x512xbf16>, vector<512x128xbf16>, vector<8x128xf32> -> vector<8x128xf32>
    %c0_45 = arith.constant 0 : index
    %c0_46 = arith.constant 0 : index
    %116 = vector.load %arg14[%c0_45, %c0_46] : memref<1x128xf32, #tpu.memory_space<vmem>>, vector<1x128xf32>
    %117 = vector.broadcast %116 : vector<1x128xf32> to vector<8x128xf32>
    %118 = arith.addf %115, %117 : vector<8x128xf32>
    %119 = arith.addf %74, %118 : vector<8x128xf32>
    %120 = arith.addf %119, %1 : vector<8x128xf32>
    %cst_47 = arith.constant dense<0.000000e+00> : vector<128xf32>
    %121 = vector.multi_reduction <add>, %120, %cst_47 [0] : vector<8x128xf32> to vector<128xf32>
    %122 = vector.shape_cast %121 : vector<128xf32> to vector<1x128xf32>
    %cst_48 = arith.constant 8.000000e+00 : f32
    %123 = vector.broadcast %cst_48 : f32 to vector<1x128xf32>
    %124 = arith.divf %122, %123 : vector<1x128xf32>
    %125 = vector.shape_cast %124 : vector<1x128xf32> to vector<1x1x128xf32>
    %c0_49 = arith.constant 0 : index
    %c0_50 = arith.constant 0 : index
    %c0_51 = arith.constant 0 : index
    %126 = vector.load %arg15[%c0_49, %c0_50, %c0_51] : memref<1x1x128xf32, #tpu.memory_space<vmem>>, vector<1x1x128xf32>
    tpu.vector_store %arg15[%c0_49, %c0_50, %c0_51], %125 {strides = array<i32>} : memref<1x1x128xf32, #tpu.memory_space<vmem>>, vector<1x1x128xf32>,
    return
  }
  func.func @transform_0(%arg0: i32) -> (i32, i32, i32) {
    %c0_i32 = arith.constant 0 : i32
    %c0_i32_0 = arith.constant 0 : i32
    %c0_i32_1 = arith.constant 0 : i32
    return %arg0, %c0_i32, %c0_i32_0 : i32, i32, i32
  }
  func.func @transform_1(%arg0: i32) -> (i32, i32) {
    %c0_i32 = arith.constant 0 : i32
    %c0_i32_0 = arith.constant 0 : i32
    %c0_i32_1 = arith.constant 0 : i32
    return %c0_i32, %c0_i32_0 : i32, i32
  }
  func.func @transform_2(%arg0: i32) -> (i32, i32) {
    %c0_i32 = arith.constant 0 : i32
    %c0_i32_0 = arith.constant 0 : i32
    %c0_i32_1 = arith.constant 0 : i32
    return %c0_i32, %c0_i32_0 : i32, i32
  }
  func.func @transform_3(%arg0: i32) -> (i32, i32) {
    %c0_i32 = arith.constant 0 : i32
    %c0_i32_0 = arith.constant 0 : i32
    %c0_i32_1 = arith.constant 0 : i32
    return %c0_i32, %c0_i32_0 : i32, i32
  }
  func.func @transform_4(%arg0: i32) -> (i32, i32) {
    %c0_i32 = arith.constant 0 : i32
    %c0_i32_0 = arith.constant 0 : i32
    %c0_i32_1 = arith.constant 0 : i32
    return %c0_i32, %c0_i32_0 : i32, i32
  }
  func.func @transform_5(%arg0: i32) -> (i32, i32) {
    %c0_i32 = arith.constant 0 : i32
    %c0_i32_0 = arith.constant 0 : i32
    %c0_i32_1 = arith.constant 0 : i32
    return %c0_i32, %c0_i32_0 : i32, i32
  }
  func.func @transform_6(%arg0: i32) -> (i32, i32) {
    %c0_i32 = arith.constant 0 : i32
    %c0_i32_0 = arith.constant 0 : i32
    %c0_i32_1 = arith.constant 0 : i32
    return %c0_i32, %c0_i32_0 : i32, i32
  }
  func.func @transform_7(%arg0: i32) -> (i32, i32) {
    %c0_i32 = arith.constant 0 : i32
    %c0_i32_0 = arith.constant 0 : i32
    %c0_i32_1 = arith.constant 0 : i32
    return %c0_i32, %c0_i32_0 : i32, i32
  }
  func.func @transform_8(%arg0: i32) -> (i32, i32) {
    %c0_i32 = arith.constant 0 : i32
    %c0_i32_0 = arith.constant 0 : i32
    %c0_i32_1 = arith.constant 0 : i32
    return %c0_i32, %c0_i32_0 : i32, i32
  }
  func.func @transform_9(%arg0: i32) -> (i32, i32) {
    %c0_i32 = arith.constant 0 : i32
    %c0_i32_0 = arith.constant 0 : i32
    %c0_i32_1 = arith.constant 0 : i32
    return %c0_i32, %c0_i32_0 : i32, i32
  }
  func.func @transform_10(%arg0: i32) -> (i32, i32) {
    %c0_i32 = arith.constant 0 : i32
    %c0_i32_0 = arith.constant 0 : i32
    %c0_i32_1 = arith.constant 0 : i32
    return %c0_i32, %c0_i32_0 : i32, i32
  }
  func.func @transform_11(%arg0: i32) -> (i32, i32) {
    %c0_i32 = arith.constant 0 : i32
    %c0_i32_0 = arith.constant 0 : i32
    %c0_i32_1 = arith.constant 0 : i32
    return %c0_i32, %c0_i32_0 : i32, i32
  }
  func.func @transform_12(%arg0: i32) -> (i32, i32) {
    %c0_i32 = arith.constant 0 : i32
    %c0_i32_0 = arith.constant 0 : i32
    %c0_i32_1 = arith.constant 0 : i32
    return %c0_i32, %c0_i32_0 : i32, i32
  }
  func.func @transform_13(%arg0: i32) -> (i32, i32) {
    %c0_i32 = arith.constant 0 : i32
    %c0_i32_0 = arith.constant 0 : i32
    %c0_i32_1 = arith.constant 0 : i32
    return %c0_i32, %c0_i32_0 : i32, i32
  }
  func.func @transform_14(%arg0: i32) -> (i32, i32, i32) {
    %c0_i32 = arith.constant 0 : i32
    %c0_i32_0 = arith.constant 0 : i32
    %c0_i32_1 = arith.constant 0 : i32
    return %arg0, %c0_i32, %c0_i32_0 : i32, i32, i32
  }
}

</mosaic_0001>

<llo_original>
// kernel: tpu_custom_call.1
$region0: #{tpu_custom_call.1}
  #allocation0 [shape = 'u32[]', space=smem, size = 0x4, offset = 0x4, fixed_abs, tag = 'smem constant byte address 0x4 - core index']
  #allocation1 [shape = 'u32[144,128]{1,0:T(1,128)}', space=vmem, size = 0x12000, scoped, tag = 'internal scratch']
  %s0 = inlined_call_operand.hbm [shape: f32[2,8,128], index: 0, kind: input, shape index: {}]
  %s1 = inlined_call_operand.hbm [shape: f32[8,128], index: 1, kind: input, shape index: {}]
  %s2 = inlined_call_operand.hbm [shape: f32[1,128], index: 2, kind: input, shape index: {}]
  %s3 = inlined_call_operand.hbm [shape: f32[1,128], index: 3, kind: input, shape index: {}]
  %s4 = inlined_call_operand.hbm [shape: bf16[128,384], index: 4, kind: input, shape index: {}]
  %s5 = inlined_call_operand.vmem [shape: f32[1,384], index: 5, kind: input, shape index: {}]
  %s6 = inlined_call_operand.hbm [shape: bf16[128,128], index: 6, kind: input, shape index: {}]
  %s7 = inlined_call_operand.vmem [shape: f32[1,128], index: 7, kind: input, shape index: {}]
  %s8 = inlined_call_operand.vmem [shape: f32[1,128], index: 8, kind: input, shape index: {}]
  %s9 = inlined_call_operand.vmem [shape: f32[1,128], index: 9, kind: input, shape index: {}]
  %s10 = inlined_call_operand.hbm [shape: bf16[128,512], index: 10, kind: input, shape index: {}]
  %s11 = inlined_call_operand.vmem [shape: f32[1,512], index: 11, kind: input, shape index: {}]
  %s12 = inlined_call_operand.hbm [shape: bf16[512,128], index: 12, kind: input, shape index: {}]
  %s13 = inlined_call_operand.vmem [shape: f32[1,128], index: 13, kind: input, shape index: {}]
  %s14 = inlined_call_operand.hbm [shape: f32[2,1,128], index: 14, kind: output, shape index: {}]
  %s15 = sld [smem:[#allocation0]]
  $region121: #{tpu_custom_call.1} parent=0
    _
  %s17 = ssub.s32 1, %s15
  %s18 = scalar_select 0, %s17, %s15
  $region1: #{tpu_custom_call.1} parent=0
    #allocation2 [shape = 'u8[8192]{0}', space=vmem, size = 0x2000, scoped, tag = 'input window, operand 0']
    #allocation3 [shape = 's32[2]{0}', space=sflag, size = 0x8, scoped, tag = 'scoped memory for tpu_custom_call.1']
    #allocation4 [shape = 's32[2]{0}', space=sflag, size = 0x8, scoped, tag = 'scoped memory for tpu_custom_call.1']
    #allocation5 [shape = 'u8[4096]{0}', space=vmem, size = 0x1000, scoped, tag = 'input window, operand 1, single buffered']
    #allocation6 [shape = 's32[1]{0}', space=sflag, size = 0x4, scoped, tag = 'scoped memory for tpu_custom_call.1']
    #allocation7 [shape = 'u8[512]{0}', space=vmem, size = 0x400, scoped, tag = 'input window, operand 2, single buffered']
    #allocation8 [shape = 'u8[512]{0}', space=vmem, size = 0x400, scoped, tag = 'input window, operand 3, single buffered']
    #allocation9 [shape = 's32[1]{0}', space=sflag, size = 0x4, scoped, tag = 'scoped memory for tpu_custom_call.1']
    #allocation10 [shape = 'u8[98304]{0}', space=vmem, size = 0x18000, scoped, tag = 'input window, operand 4, single buffered']
    #allocation11 [shape = 'u8[32768]{0}', space=vmem, size = 0x8000, scoped, tag = 'input window, operand 6, single buffered']
    #allocation12 [shape = 's32[1]{0}', space=sflag, size = 0x4, scoped, tag = 'scoped memory for tpu_custom_call.1']
    #allocation13 [shape = 'u8[131072]{0}', space=vmem, size = 0x20000, scoped, tag = 'input window, operand 10, single buffered']
    #allocation14 [shape = 'u8[131072]{0}', space=vmem, size = 0x20000, scoped, tag = 'input window, operand 12, single buffered']
    #allocation15 [shape = 's32[1]{0}', space=sflag, size = 0x4, scoped, tag = 'scoped memory for tpu_custom_call.1']
    #allocation16 [shape = 'u8[1024]{0}', space=vmem, size = 0x400, scoped, tag = 'output window, operand 0']
    %19 = vsyncpa [#allocation3], 0
    %s20 = scalar_lea.sflag [#allocation3], 1
    %21 = vsyncpa %s20, 0
    %22 = vsyncpa [#allocation6], 0
    %23 = vsyncpa [#allocation9], 0
    %24 = vsyncpa [#allocation12], 0
    %25 = vsyncpa [#allocation15], 0
    %26 = vsyncpa [#allocation4], 0
    %s27 = scalar_lea.sflag [#allocation4], 1
    %28 = vsyncpa %s27, 0
    loop: start=0, step=1, limit=4
    $region2: #{tpu_custom_call.1} parent=1 // loop_pre_header
      _
    $region3: #{tpu_custom_call.1} parent=1 // loop_header
      %s30 = sphi 0, %s34
      %p31 = scmp.ge.s32.totalorder %s30, 4
      %s40 = sphi 0, %s42
      %s43 = sphi 0, %s40
      %s44 = sphi 0, %s43
      %s60 = sphi 0, %s44
      %s64 = sphi 0, %s64
      %s66 = sphi 0, %s64
      %s67 = sphi 0, %s66
      %s81 = sphi 0, %s67
      %s85 = sphi 0, %s85
      %s87 = sphi 0, %s85
      %s88 = sphi 0, %s87
      %s102 = sphi 0, %s88
      %s106 = sphi 0, %s106
      %s108 = sphi 0, %s106
      %s109 = sphi 0, %s108
      %s123 = sphi 0, %s109
      %s127 = sphi 0, %s127
      %s129 = sphi 0, %s127
      %s130 = sphi 0, %s129
      %s144 = sphi 0, %s130
      %s148 = sphi 0, %s148
      %s150 = sphi 0, %s148
      %s151 = sphi 0, %s150
      %s165 = sphi 0, %s151
      %s169 = sphi 0, %s169
      %s171 = sphi 0, %s169
      %s172 = sphi 0, %s171
      %s186 = sphi 0, %s172
      %s190 = sphi 0, %s190
      %s192 = sphi 0, %s190
      %s193 = sphi 0, %s192
      %s207 = sphi 0, %s193
      %s211 = sphi 0, %s211
      %s213 = sphi 0, %s211
      %s214 = sphi 0, %s213
      %s228 = sphi 0, %s214
      %s232 = sphi 0, %s232
      %s234 = sphi 0, %s232
      %s235 = sphi 0, %s234
      %s249 = sphi 0, %s235
      %s253 = sphi 0, %s253
      %s255 = sphi 0, %s253
      %s256 = sphi 0, %s255
      %s270 = sphi 0, %s256
      %s274 = sphi 0, %s274
      %s276 = sphi 0, %s274
      %s277 = sphi 0, %s276
      %s291 = sphi 0, %s277
      %s295 = sphi 0, %s295
      %s297 = sphi 0, %s295
      %s298 = sphi 0, %s297
      %s312 = sphi 0, %s298
      %s316 = sphi 0, %s316
      %s318 = sphi 0, %s316
      %s319 = sphi 0, %s318
      %s333 = sphi 0, %s319
      %s339 = sphi 0, %s341
      %s342 = sphi 0, %s339
      %s343 = sphi 0, %s342
      %s359 = sphi 0, %s343
    $region4: #{tpu_custom_call.1} parent=1 // loop_header_branch
      %33 = sbr.rel (%p31) target = $region8
    $region5: #{tpu_custom_call.1} parent=1 // loop_body
      %s35 = ssub.s32 %s30, 1
      %s36 = ssub.s32 %s30, 2
      %s37 = sadd.s32 %s30, 1
      %s38 = ssub.s32 %s30, %s37
      %p39 = scmp.eq.s32.totalorder %s38, 0
      %s41 = sadd.s32 %s40, 1
      %s42 = scalar_select %p39, %s40, %s41
      %p45 = pneg %p39
      %p46 = scmp.eq.s32.totalorder %s30, 1
      %p47 = por %p45, %p46
      %p48 = scmp.ne.s32.totalorder %s40, %s43
      %p49 = scmp.eq.s32.totalorder %s30, 0
      %p50 = por %p48, %p49
      %p51 = scmp.ne.s32.totalorder %s40, %s43
      %p52 = scmp.eq.s32.totalorder %s35, 1
      %p53 = por %p51, %p52
      %p54 = scmp.ne.s32.totalorder %s43, %s44
      %p55 = scmp.eq.s32.totalorder %s35, 0
      %p56 = por %p54, %p55
      %p57 = scmp.ne.s32.totalorder %s43, %s44
      %p58 = scmp.eq.s32.totalorder %s36, 1
      %p59 = por %p57, %p58
      %p61 = scmp.ne.s32.totalorder %s44, %s60
      %p62 = scmp.eq.s32.totalorder %s36, 0
      %p63 = por %p61, %p62
      %s65 = sadd.s32 %s64, 1
      %p68 = scmp.eq.s32.totalorder %s30, 1
      %p69 = scmp.ne.s32.totalorder %s64, %s66
      %p70 = scmp.eq.s32.totalorder %s30, 0
      %p71 = por %p69, %p70
      %p72 = scmp.ne.s32.totalorder %s64, %s66
      %p73 = scmp.eq.s32.totalorder %s35, 1
      %p74 = por %p72, %p73
      %p75 = scmp.ne.s32.totalorder %s66, %s67
      %p76 = scmp.eq.s32.totalorder %s35, 0
      %p77 = por %p75, %p76
      %p78 = scmp.ne.s32.totalorder %s66, %s67
      %p79 = scmp.eq.s32.totalorder %s36, 1
      %p80 = por %p78, %p79
      %p82 = scmp.ne.s32.totalorder %s67, %s81
      %p83 = scmp.eq.s32.totalorder %s36, 0
      %p84 = por %p82, %p83
      %s86 = sadd.s32 %s85, 1
      %p89 = scmp.eq.s32.totalorder %s30, 1
      %p90 = scmp.ne.s32.totalorder %s85, %s87
      %p91 = scmp.eq.s32.totalorder %s30, 0
      %p92 = por %p90, %p91
      %p93 = scmp.ne.s32.totalorder %s85, %s87
      %p94 = scmp.eq.s32.totalorder %s35, 1
      %p95 = por %p93, %p94
      %p96 = scmp.ne.s32.totalorder %s87, %s88
      %p97 = scmp.eq.s32.totalorder %s35, 0
      %p98 = por %p96, %p97
      %p99 = scmp.ne.s32.totalorder %s87, %s88
      %p100 = scmp.eq.s32.totalorder %s36, 1
      %p101 = por %p99, %p100
      %p103 = scmp.ne.s32.totalorder %s88, %s102
      %p104 = scmp.eq.s32.totalorder %s36, 0
      %p105 = por %p103, %p104
      %s107 = sadd.s32 %s106, 1
      %p110 = scmp.eq.s32.totalorder %s30, 1
      %p111 = scmp.ne.s32.totalorder %s106, %s108
      %p112 = scmp.eq.s32.totalorder %s30, 0
      %p113 = por %p111, %p112
      %p114 = scmp.ne.s32.totalorder %s106, %s108
      %p115 = scmp.eq.s32.totalorder %s35, 1
      %p116 = por %p114, %p115
      %p117 = scmp.ne.s32.totalorder %s108, %s109
      %p118 = scmp.eq.s32.totalorder %s35, 0
      %p119 = por %p117, %p118
      %p120 = scmp.ne.s32.totalorder %s108, %s109
      %p121 = scmp.eq.s32.totalorder %s36, 1
      %p122 = por %p120, %p121
      %p124 = scmp.ne.s32.totalorder %s109, %s123
      %p125 = scmp.eq.s32.totalorder %s36, 0
      %p126 = por %p124, %p125
      %s128 = sadd.s32 %s127, 1
      %p131 = scmp.eq.s32.totalorder %s30, 1
      %p132 = scmp.ne.s32.totalorder %s127, %s129
      %p133 = scmp.eq.s32.totalorder %s30, 0
      %p134 = por %p132, %p133
      %p135 = scmp.ne.s32.totalorder %s127, %s129
      %p136 = scmp.eq.s32.totalorder %s35, 1
      %p137 = por %p135, %p136
      %p138 = scmp.ne.s32.totalorder %s129, %s130
      %p139 = scmp.eq.s32.totalorder %s35, 0
      %p140 = por %p138, %p139
      %p141 = scmp.ne.s32.totalorder %s129, %s130
      %p142 = scmp.eq.s32.totalorder %s36, 1
      %p143 = por %p141, %p142
      %p145 = scmp.ne.s32.totalorder %s130, %s144
      %p146 = scmp.eq.s32.totalorder %s36, 0
      %p147 = por %p145, %p146
      %s149 = sadd.s32 %s148, 1
      %p152 = scmp.eq.s32.totalorder %s30, 1
      %p153 = scmp.ne.s32.totalorder %s148, %s150
      %p154 = scmp.eq.s32.totalorder %s30, 0
      %p155 = por %p153, %p154
      %p156 = scmp.ne.s32.totalorder %s148, %s150
      %p157 = scmp.eq.s32.totalorder %s35, 1
      %p158 = por %p156, %p157
      %p159 = scmp.ne.s32.totalorder %s150, %s151
      %p160 = scmp.eq.s32.totalorder %s35, 0
      %p161 = por %p159, %p160
      %p162 = scmp.ne.s32.totalorder %s150, %s151
      %p163 = scmp.eq.s32.totalorder %s36, 1
      %p164 = por %p162, %p163
      %p166 = scmp.ne.s32.totalorder %s151, %s165
      %p167 = scmp.eq.s32.totalorder %s36, 0
      %p168 = por %p166, %p167
      %s170 = sadd.s32 %s169, 1
      %p173 = scmp.eq.s32.totalorder %s30, 1
      %p174 = scmp.ne.s32.totalorder %s169, %s171
      %p175 = scmp.eq.s32.totalorder %s30, 0
      %p176 = por %p174, %p175
      %p177 = scmp.ne.s32.totalorder %s169, %s171
      %p178 = scmp.eq.s32.totalorder %s35, 1
      %p179 = por %p177, %p178
      %p180 = scmp.ne.s32.totalorder %s171, %s172
      %p181 = scmp.eq.s32.totalorder %s35, 0
      %p182 = por %p180, %p181
      %p183 = scmp.ne.s32.totalorder %s171, %s172
      %p184 = scmp.eq.s32.totalorder %s36, 1
      %p185 = por %p183, %p184
      %p187 = scmp.ne.s32.totalorder %s172, %s186
      %p188 = scmp.eq.s32.totalorder %s36, 0
      %p189 = por %p187, %p188
      %s191 = sadd.s32 %s190, 1
      %p194 = scmp.eq.s32.totalorder %s30, 1
      %p195 = scmp.ne.s32.totalorder %s190, %s192
      %p196 = scmp.eq.s32.totalorder %s30, 0
      %p197 = por %p195, %p196
      %p198 = scmp.ne.s32.totalorder %s190, %s192
      %p199 = scmp.eq.s32.totalorder %s35, 1
      %p200 = por %p198, %p199
      %p201 = scmp.ne.s32.totalorder %s192, %s193
      %p202 = scmp.eq.s32.totalorder %s35, 0
      %p203 = por %p201, %p202
      %p204 = scmp.ne.s32.totalorder %s192, %s193
      %p205 = scmp.eq.s32.totalorder %s36, 1
      %p206 = por %p204, %p205
      %p208 = scmp.ne.s32.totalorder %s193, %s207
      %p209 = scmp.eq.s32.totalorder %s36, 0
      %p210 = por %p208, %p209
      %s212 = sadd.s32 %s211, 1
      %p215 = scmp.eq.s32.totalorder %s30, 1
      %p216 = scmp.ne.s32.totalorder %s211, %s213
      %p217 = scmp.eq.s32.totalorder %s30, 0
      %p218 = por %p216, %p217
      %p219 = scmp.ne.s32.totalorder %s211, %s213
      %p220 = scmp.eq.s32.totalorder %s35, 1
      %p221 = por %p219, %p220
      %p222 = scmp.ne.s32.totalorder %s213, %s214
      %p223 = scmp.eq.s32.totalorder %s35, 0
      %p224 = por %p222, %p223
      %p225 = scmp.ne.s32.totalorder %s213, %s214
      %p226 = scmp.eq.s32.totalorder %s36, 1
      %p227 = por %p225, %p226
      %p229 = scmp.ne.s32.totalorder %s214, %s228
      %p230 = scmp.eq.s32.totalorder %s36, 0
      %p231 = por %p229, %p230
      %s233 = sadd.s32 %s232, 1
      %p236 = scmp.eq.s32.totalorder %s30, 1
      %p237 = scmp.ne.s32.totalorder %s232, %s234
      %p238 = scmp.eq.s32.totalorder %s30, 0
      %p239 = por %p237, %p238
      %p240 = scmp.ne.s32.totalorder %s232, %s234
      %p241 = scmp.eq.s32.totalorder %s35, 1
      %p242 = por %p240, %p241
      %p243 = scmp.ne.s32.totalorder %s234, %s235
      %p244 = scmp.eq.s32.totalorder %s35, 0
      %p245 = por %p243, %p244
      %p246 = scmp.ne.s32.totalorder %s234, %s235
      %p247 = scmp.eq.s32.totalorder %s36, 1
      %p248 = por %p246, %p247
      %p250 = scmp.ne.s32.totalorder %s235, %s249
      %p251 = scmp.eq.s32.totalorder %s36, 0
      %p252 = por %p250, %p251
      %s254 = sadd.s32 %s253, 1
      %p257 = scmp.eq.s32.totalorder %s30, 1
      %p258 = scmp.ne.s32.totalorder %s253, %s255
      %p259 = scmp.eq.s32.totalorder %s30, 0
      %p260 = por %p258, %p259
      %p261 = scmp.ne.s32.totalorder %s253, %s255
      %p262 = scmp.eq.s32.totalorder %s35, 1
      %p263 = por %p261, %p262
      %p264 = scmp.ne.s32.totalorder %s255, %s256
      %p265 = scmp.eq.s32.totalorder %s35, 0
      %p266 = por %p264, %p265
      %p267 = scmp.ne.s32.totalorder %s255, %s256
      %p268 = scmp.eq.s32.totalorder %s36, 1
      %p269 = por %p267, %p268
      %p271 = scmp.ne.s32.totalorder %s256, %s270
      %p272 = scmp.eq.s32.totalorder %s36, 0
      %p273 = por %p271, %p272
      %s275 = sadd.s32 %s274, 1
      %p278 = scmp.eq.s32.totalorder %s30, 1
      %p279 = scmp.ne.s32.totalorder %s274, %s276
      %p280 = scmp.eq.s32.totalorder %s30, 0
      %p281 = por %p279, %p280
      %p282 = scmp.ne.s32.totalorder %s274, %s276
      %p283 = scmp.eq.s32.totalorder %s35, 1
      %p284 = por %p282, %p283
      %p285 = scmp.ne.s32.totalorder %s276, %s277
      %p286 = scmp.eq.s32.totalorder %s35, 0
      %p287 = por %p285, %p286
      %p288 = scmp.ne.s32.totalorder %s276, %s277
      %p289 = scmp.eq.s32.totalorder %s36, 1
      %p290 = por %p288, %p289
      %p292 = scmp.ne.s32.totalorder %s277, %s291
      %p293 = scmp.eq.s32.totalorder %s36, 0
      %p294 = por %p292, %p293
      %s296 = sadd.s32 %s295, 1
      %p299 = scmp.eq.s32.totalorder %s30, 1
      %p300 = scmp.ne.s32.totalorder %s295, %s297
      %p301 = scmp.eq.s32.totalorder %s30, 0
      %p302 = por %p300, %p301
      %p303 = scmp.ne.s32.totalorder %s295, %s297
      %p304 = scmp.eq.s32.totalorder %s35, 1
      %p305 = por %p303, %p304
      %p306 = scmp.ne.s32.totalorder %s297, %s298
      %p307 = scmp.eq.s32.totalorder %s35, 0
      %p308 = por %p306, %p307
      %p309 = scmp.ne.s32.totalorder %s297, %s298
      %p310 = scmp.eq.s32.totalorder %s36, 1
      %p311 = por %p309, %p310
      %p313 = scmp.ne.s32.totalorder %s298, %s312
      %p314 = scmp.eq.s32.totalorder %s36, 0
      %p315 = por %p313, %p314
      %s317 = sadd.s32 %s316, 1
      %p320 = scmp.eq.s32.totalorder %s30, 1
      %p321 = scmp.ne.s32.totalorder %s316, %s318
      %p322 = scmp.eq.s32.totalorder %s30, 0
      %p323 = por %p321, %p322
      %p324 = scmp.ne.s32.totalorder %s316, %s318
      %p325 = scmp.eq.s32.totalorder %s35, 1
      %p326 = por %p324, %p325
      %p327 = scmp.ne.s32.totalorder %s318, %s319
      %p328 = scmp.eq.s32.totalorder %s35, 0
      %p329 = por %p327, %p328
      %p330 = scmp.ne.s32.totalorder %s318, %s319
      %p331 = scmp.eq.s32.totalorder %s36, 1
      %p332 = por %p330, %p331
      %p334 = scmp.ne.s32.totalorder %s319, %s333
      %p335 = scmp.eq.s32.totalorder %s36, 0
      %p336 = por %p334, %p335
      %s337 = ssub.s32 %s30, %s37
      %p338 = scmp.eq.s32.totalorder %s337, 0
      %s340 = sadd.s32 %s339, 1
      %s341 = scalar_select %p338, %s339, %s340
      %p344 = pneg %p338
      %p345 = scmp.eq.s32.totalorder %s30, 1
      %p346 = por %p344, %p345
      %p347 = scmp.ne.s32.totalorder %s339, %s342
      %p348 = scmp.eq.s32.totalorder %s30, 0
      %p349 = por %p347, %p348
      %p350 = scmp.ne.s32.totalorder %s339, %s342
      %p351 = scmp.eq.s32.totalorder %s35, 1
      %p352 = por %p350, %p351
      %p353 = scmp.ne.s32.totalorder %s342, %s343
      %p354 = scmp.eq.s32.totalorder %s35, 0
      %p355 = por %p353, %p354
      %p356 = scmp.ne.s32.totalorder %s342, %s343
      %p357 = scmp.eq.s32.totalorder %s36, 1
      %p358 = por %p356, %p357
      %p360 = scmp.ne.s32.totalorder %s343, %s359
      %p361 = scmp.eq.s32.totalorder %s36, 0
      %p362 = por %p360, %p361
      %p363 = scmp.le.s32.totalorder 1, %s30
      %p364 = scmp.lt.s32.totalorder %s30, 3
      %p365 = pnand %p363, %p364
      %p366 = pneg %p365
      // Predicated region
      $region9: #{tpu_custom_call.1} parent=5 // pred_check
        _
      $region10: #{tpu_custom_call.1} parent=5 // pred_check_branch
        %368 = sbr.rel (%p365) target = $region12
      $region11: #{tpu_custom_call.1} parent=5 // pred_region
        %s369 = ssub.s32 %s30, 1
        // Predicated region
        $region13: #{tpu_custom_call.1} parent=11 // pred_check
          %p370 = pneg %p77
        $region14: #{tpu_custom_call.1} parent=11 // pred_check_branch
          %372 = sbr.rel (%p370) target = $region16
        $region15: #{tpu_custom_call.1} parent=11 // pred_region
          %s374 = ssub.s32 128, 128
          %375 = vsyncadd [#allocation6], %s374
          %s377 = sshll.u32 [#allocation5], 4
          %s378 = int_to_ptr.vmem [resolvable:$true] %s377
          %380 = dma.hbm_to_vmem [thread:$0]  %s1, 128, %s378, [#allocation6]
        $region16: #{tpu_custom_call.1} parent=11 // pred_fallthru
          _
        // Predicated region
        $region17: #{tpu_custom_call.1} parent=11 // pred_check
          %p381 = pneg %p98
        $region18: #{tpu_custom_call.1} parent=11 // pred_check_branch
          %383 = sbr.rel (%p381) target = $region20
        $region19: #{tpu_custom_call.1} parent=11 // pred_region
          %s385 = ssub.s32 16, 16
          %386 = vsyncadd [#allocation6], %s385
          %s388 = sshll.u32 [#allocation7], 4
          %s389 = int_to_ptr.vmem [resolvable:$true] %s388
          %391 = dma.hbm_to_vmem [thread:$0]  %s2, 16, %s389, [#allocation6]
        $region20: #{tpu_custom_call.1} parent=11 // pred_fallthru
          _
        // Predicated region
        $region21: #{tpu_custom_call.1} parent=11 // pred_check
          %p392 = pneg %p119
        $region22: #{tpu_custom_call.1} parent=11 // pred_check_branch
          %394 = sbr.rel (%p392) target = $region24
        $region23: #{tpu_custom_call.1} parent=11 // pred_region
          %s396 = ssub.s32 16, 16
          %397 = vsyncadd [#allocation9], %s396
          %s399 = sshll.u32 [#allocation8], 4
          %s400 = int_to_ptr.vmem [resolvable:$true] %s399
          %402 = dma.hbm_to_vmem [thread:$0]  %s3, 16, %s400, [#allocation9]
        $region24: #{tpu_custom_call.1} parent=11 // pred_fallthru
          _
        // Predicated region
        $region25: #{tpu_custom_call.1} parent=11 // pred_check
          %p403 = pneg %p140
        $region26: #{tpu_custom_call.1} parent=11 // pred_check_branch
          %405 = sbr.rel (%p403) target = $region28
        $region27: #{tpu_custom_call.1} parent=11 // pred_region
          %s407 = ssub.s32 3072, 3072
          %408 = vsyncadd [#allocation9], %s407
          %s409 = sshll.u32 [#allocation10], 4
          %s410 = int_to_ptr.vmem [resolvable:$true] %s409
          %415 = dma.hbm_to_vmem [thread:$0]  %s4, 3072, %s410, [#allocation9], 192, 192, 12
        $region28: #{tpu_custom_call.1} parent=11 // pred_fallthru
          _
        // Predicated region
        $region29: #{tpu_custom_call.1} parent=11 // pred_check
          %p416 = pneg %p161
        $region30: #{tpu_custom_call.1} parent=11 // pred_check_branch
          %418 = sbr.rel (%p416) target = $region32
        $region31: #{tpu_custom_call.1} parent=11 // pred_region
          _
        $region32: #{tpu_custom_call.1} parent=11 // pred_fallthru
          _
        // Predicated region
        $region33: #{tpu_custom_call.1} parent=11 // pred_check
          %p419 = pneg %p182
        $region34: #{tpu_custom_call.1} parent=11 // pred_check_branch
          %421 = sbr.rel (%p419) target = $region36
        $region35: #{tpu_custom_call.1} parent=11 // pred_region
          %s423 = ssub.s32 1024, 1024
          %424 = vsyncadd [#allocation12], %s423
          %s425 = sshll.u32 [#allocation11], 4
          %s426 = int_to_ptr.vmem [resolvable:$true] %s425
          %431 = dma.hbm_to_vmem [thread:$0]  %s6, 1024, %s426, [#allocation12], 64, 64, 4
        $region36: #{tpu_custom_call.1} parent=11 // pred_fallthru
          _
        // Predicated region
        $region37: #{tpu_custom_call.1} parent=11 // pred_check
          %p432 = pneg %p203
        $region38: #{tpu_custom_call.1} parent=11 // pred_check_branch
          %434 = sbr.rel (%p432) target = $region40
        $region39: #{tpu_custom_call.1} parent=11 // pred_region
          _
        $region40: #{tpu_custom_call.1} parent=11 // pred_fallthru
          _
        // Predicated region
        $region41: #{tpu_custom_call.1} parent=11 // pred_check
          %p435 = pneg %p224
        $region42: #{tpu_custom_call.1} parent=11 // pred_check_branch
          %437 = sbr.rel (%p435) target = $region44
        $region43: #{tpu_custom_call.1} parent=11 // pred_region
          _
        $region44: #{tpu_custom_call.1} parent=11 // pred_fallthru
          _
        // Predicated region
        $region45: #{tpu_custom_call.1} parent=11 // pred_check
          %p438 = pneg %p245
        $region46: #{tpu_custom_call.1} parent=11 // pred_check_branch
          %440 = sbr.rel (%p438) target = $region48
        $region47: #{tpu_custom_call.1} parent=11 // pred_region
          _
        $region48: #{tpu_custom_call.1} parent=11 // pred_fallthru
          _
        // Predicated region
        $region49: #{tpu_custom_call.1} parent=11 // pred_check
          %p441 = pneg %p266
        $region50: #{tpu_custom_call.1} parent=11 // pred_check_branch
          %443 = sbr.rel (%p441) target = $region52
        $region51: #{tpu_custom_call.1} parent=11 // pred_region
          %s445 = ssub.s32 4096, 4096
          %446 = vsyncadd [#allocation12], %s445
          %s447 = sshll.u32 [#allocation13], 4
          %s448 = int_to_ptr.vmem [resolvable:$true] %s447
          %453 = dma.hbm_to_vmem [thread:$0]  %s10, 4096, %s448, [#allocation12], 256, 256, 16
        $region52: #{tpu_custom_call.1} parent=11 // pred_fallthru
          _
        // Predicated region
        $region53: #{tpu_custom_call.1} parent=11 // pred_check
          %p454 = pneg %p287
        $region54: #{tpu_custom_call.1} parent=11 // pred_check_branch
          %456 = sbr.rel (%p454) target = $region56
        $region55: #{tpu_custom_call.1} parent=11 // pred_region
          _
        $region56: #{tpu_custom_call.1} parent=11 // pred_fallthru
          _
        // Predicated region
        $region57: #{tpu_custom_call.1} parent=11 // pred_check
          %p457 = pneg %p308
        $region58: #{tpu_custom_call.1} parent=11 // pred_check_branch
          %459 = sbr.rel (%p457) target = $region60
        $region59: #{tpu_custom_call.1} parent=11 // pred_region
          %s461 = ssub.s32 4096, 4096
          %462 = vsyncadd [#allocation15], %s461
          %s463 = sshll.u32 [#allocation14], 4
          %s464 = int_to_ptr.vmem [resolvable:$true] %s463
          %469 = dma.hbm_to_vmem [thread:$0]  %s12, 4096, %s464, [#allocation15], 64, 64, 4
        $region60: #{tpu_custom_call.1} parent=11 // pred_fallthru
          _
        // Predicated region
        $region61: #{tpu_custom_call.1} parent=11 // pred_check
          %p470 = pneg %p329
        $region62: #{tpu_custom_call.1} parent=11 // pred_check_branch
          %472 = sbr.rel (%p470) target = $region64
        $region63: #{tpu_custom_call.1} parent=11 // pred_region
          _
        $region64: #{tpu_custom_call.1} parent=11 // pred_fallthru
          _
      $region12: #{tpu_custom_call.1} parent=5 // pred_fallthru
        _
      %p473 = scmp.lt.s32.totalorder %s30, 2
      // Predicated region
      $region65: #{tpu_custom_call.1} parent=5 // pred_check
        %p474 = pneg %p473
      $region66: #{tpu_custom_call.1} parent=5 // pred_check_branch
        %476 = sbr.rel (%p474) target = $region68
      $region67: #{tpu_custom_call.1} parent=5 // pred_region
        // Predicated region
        $region69: #{tpu_custom_call.1} parent=67 // pred_check
          %p477 = pneg %p50
        $region70: #{tpu_custom_call.1} parent=67 // pred_check_branch
          %479 = sbr.rel (%p477) target = $region72
        $region71: #{tpu_custom_call.1} parent=67 // pred_region
          %s480 = sand.u32 %s40, 1
          %s481 = scalar_lea.sflag [#allocation3], %s480
          %s482 = sand.u32 %s40, 1
          %s483 = smul.addr %s482, 8
          %s484 = scalar_lea.vmem [#allocation2], %s483
          %s486 = ssub.s32 128, 128
          %487 = vsyncadd %s481, %s486
          %s488 = smul.addr %s30, 128
          %s489 = scalar_lea.hbm %s0, %s488
          %s491 = sshll.u32 %s484, 4
          %s492 = int_to_ptr.vmem [resolvable:$true] %s491
          %494 = dma.hbm_to_vmem [thread:$0]  %s489, 128, %s492, %s481
        $region72: #{tpu_custom_call.1} parent=67 // pred_fallthru
          _
      $region68: #{tpu_custom_call.1} parent=5 // pred_fallthru
        _
      %p495 = scmp.le.s32.totalorder 1, %s30
      %p496 = scmp.lt.s32.totalorder %s30, 3
      %p497 = pnand %p495, %p496
      %p498 = pneg %p497
      // Predicated region
      $region73: #{tpu_custom_call.1} parent=5 // pred_check
        _
      $region74: #{tpu_custom_call.1} parent=5 // pred_check_branch
        %500 = sbr.rel (%p497) target = $region76
      $region75: #{tpu_custom_call.1} parent=5 // pred_region
        %s501 = ssub.s32 %s30, 1
        %s502 = sand.u32 %s43, 1
        %s503 = scalar_lea.sflag [#allocation3], %s502
        %s504 = sand.u32 %s43, 1
        %s505 = smul.addr %s504, 8
        %s506 = scalar_lea.vmem [#allocation2], %s505
        // Predicated region
        $region77: #{tpu_custom_call.1} parent=75 // pred_check
          %p507 = pneg %p56
        $region78: #{tpu_custom_call.1} parent=75 // pred_check_branch
          %509 = sbr.rel (%p507) target = $region80
        $region79: #{tpu_custom_call.1} parent=75 // pred_region
          %510 = dma.done %s503, 128
        $region80: #{tpu_custom_call.1} parent=75 // pred_fallthru
          _
        // Predicated region
        $region81: #{tpu_custom_call.1} parent=75 // pred_check
          %p511 = pneg %p77
        $region82: #{tpu_custom_call.1} parent=75 // pred_check_branch
          %513 = sbr.rel (%p511) target = $region84
        $region83: #{tpu_custom_call.1} parent=75 // pred_region
          %514 = dma.done [#allocation6], 128
        $region84: #{tpu_custom_call.1} parent=75 // pred_fallthru
          _
        // Predicated region
        $region85: #{tpu_custom_call.1} parent=75 // pred_check
          %p515 = pneg %p98
        $region86: #{tpu_custom_call.1} parent=75 // pred_check_branch
          %517 = sbr.rel (%p515) target = $region88
        $region87: #{tpu_custom_call.1} parent=75 // pred_region
          %518 = dma.done [#allocation6], 16
        $region88: #{tpu_custom_call.1} parent=75 // pred_fallthru
          _
        // Predicated region
        $region89: #{tpu_custom_call.1} parent=75 // pred_check
          %p519 = pneg %p119
        $region90: #{tpu_custom_call.1} parent=75 // pred_check_branch
          %521 = sbr.rel (%p519) target = $region92
        $region91: #{tpu_custom_call.1} parent=75 // pred_region
          %522 = dma.done [#allocation9], 16
        $region92: #{tpu_custom_call.1} parent=75 // pred_fallthru
          _
        // Predicated region
        $region93: #{tpu_custom_call.1} parent=75 // pred_check
          %p523 = pneg %p140
        $region94: #{tpu_custom_call.1} parent=75 // pred_check_branch
          %525 = sbr.rel (%p523) target = $region96
        $region95: #{tpu_custom_call.1} parent=75 // pred_region
          %526 = dma.done [#allocation9], 3072
        $region96: #{tpu_custom_call.1} parent=75 // pred_fallthru
          _
        // Predicated region
        $region97: #{tpu_custom_call.1} parent=75 // pred_check
          %p527 = pneg %p182
        $region98: #{tpu_custom_call.1} parent=75 // pred_check_branch
          %529 = sbr.rel (%p527) target = $region100
        $region99: #{tpu_custom_call.1} parent=75 // pred_region
          %530 = dma.done [#allocation12], 1024
        $region100: #{tpu_custom_call.1} parent=75 // pred_fallthru
          _
        // Predicated region
        $region101: #{tpu_custom_call.1} parent=75 // pred_check
          %p531 = pneg %p266
        $region102: #{tpu_custom_call.1} parent=75 // pred_check_branch
          %533 = sbr.rel (%p531) target = $region104
        $region103: #{tpu_custom_call.1} parent=75 // pred_region
          %534 = dma.done [#allocation12], 4096
        $region104: #{tpu_custom_call.1} parent=75 // pred_fallthru
          _
        // Predicated region
        $region105: #{tpu_custom_call.1} parent=75 // pred_check
          %p535 = pneg %p308
        $region106: #{tpu_custom_call.1} parent=75 // pred_check_branch
          %537 = sbr.rel (%p535) target = $region108
        $region107: #{tpu_custom_call.1} parent=75 // pred_region
          %538 = dma.done [#allocation15], 4096
        $region108: #{tpu_custom_call.1} parent=75 // pred_fallthru
          _
        %s539 = sand.u32 %s43, 1
        %s540 = scalar_lea.sflag [#allocation3], %s539
        %s541 = sand.u32 %s43, 1
        %s542 = smul.addr %s541, 8
        %s543 = scalar_lea.vmem [#allocation2], %s542
        %p544 = pneg %p56
        %p545 = pneg %p53
        %p546 = pneg %p77
        %p547 = pneg %p74
        %p548 = pneg %p98
        %p549 = pneg %p95
        %p550 = pneg %p119
        %p551 = pneg %p116
        %p552 = pneg %p140
        %p553 = pneg %p137
        %p554 = pneg %p161
        %p555 = pneg %p158
        %p556 = pneg %p182
        %p557 = pneg %p179
        %p558 = pneg %p203
        %p559 = pneg %p200
        %p560 = pneg %p224
        %p561 = pneg %p221
        %p562 = pneg %p245
        %p563 = pneg %p242
        %p564 = pneg %p266
        %p565 = pneg %p263
        %p566 = pneg %p287
        %p567 = pneg %p284
        %p568 = pneg %p308
        %p569 = pneg %p305
        %p570 = pneg %p329
        %p571 = pneg %p326
        %p572 = pneg %p355
        %p573 = pneg %p352
        %s574 = sand.u32 %s342, 1
        %s575 = scalar_lea.sflag [#allocation4], %s574
        %s576 = sand.u32 %s342, 1
        %s577 = scalar_lea.vmem [#allocation16], %s576
        %v579 = vld [vmem:[%s506] sm:$0xff]
        %v580 = vld [vmem:[#allocation5] sm:$0xff]
        %v581 = vadd.f32 %v579, %v580
        %v582 = vld [vmem:[#allocation7] sm:$0x1]
        %v583 = vld [vmem:[#allocation8] sm:$0x1]
        %584 = vadd.xlane.f32.xlu0 %v581
        %v585 = vpop.xlane.xlu0 %584
        %v586 = vrcp.pop 128.0
        %v587 = vmul.f32 %v585, %v586
        %v588 = vsub.f32 %v581, %v587
        %v589 = vmul.f32 %v588, %v588
        %590 = vadd.xlane.f32.xlu0 %v589
        %v591 = vpop.xlane.xlu0 %590
        %v592 = vmul.f32 %v591, %v586
        %v593 = vadd.f32 %v592, 1e-05
        %v594 = vrsqrt.pop %v593
        %v595 = vmul.f32 %v588, %v594
        %v597 = vlaneseq
        %v598 = vshrl.u32 %v597, 7
        %v599 = vsub.s32 0, %v598
        %v600 = vrot.slane %v582, %v599
        %v602 = vmul.f32 %v595, %v600
        %v604 = vlaneseq
        %v605 = vshrl.u32 %v604, 7
        %v606 = vsub.s32 0, %v605
        %v607 = vrot.slane %v583, %v606
        %v609 = vadd.f32 %v602, %v607
        %v610 = vpack.c.bf16 %v609, %v609
        %v611 = vld [vmem:[#allocation10] sm:$0xff]
        %v612 = vld [vmem:[#allocation10 + $0x8] sm:$0xf]
        %v613 = vld [vmem:[#allocation10 + $0xc] sm:$0xff]
        %v614 = vld [vmem:[#allocation10 + $0x14] sm:$0xf]
        %v615 = vld [vmem:[#allocation10 + $0x18] sm:$0xff]
        %v616 = vld [vmem:[#allocation10 + $0x20] sm:$0xf]
        %v617 = vld [vmem:[#allocation10 + $0x24] sm:$0xff]
        %v618 = vld [vmem:[#allocation10 + $0x2c] sm:$0xf]
        %v619 = vld [vmem:[#allocation10 + $0x30] sm:$0xff]
        %v620 = vld [vmem:[#allocation10 + $0x38] sm:$0xf]
        %v621 = vld [vmem:[#allocation10 + $0x3c] sm:$0xff]
        %v622 = vld [vmem:[#allocation10 + $0x44] sm:$0xf]
        %v623 = vld [vmem:[#allocation10 + $0x48] sm:$0xff]
        %v624 = vld [vmem:[#allocation10 + $0x50] sm:$0xf]
        %v625 = vld [vmem:[#allocation10 + $0x54] sm:$0xff]
        %v626 = vld [vmem:[#allocation10 + $0x5c] sm:$0xf]
        %v627 = vld [vmem:[#allocation10 + $0x60] sm:$0xff]
        %v628 = vld [vmem:[#allocation10 + $0x68] sm:$0xf]
        %v629 = vld [vmem:[#allocation10 + $0x6c] sm:$0xff]
        %v630 = vld [vmem:[#allocation10 + $0x74] sm:$0xf]
        %v631 = vld [vmem:[#allocation10 + $0x78] sm:$0xff]
        %v632 = vld [vmem:[#allocation10 + $0x80] sm:$0xf]
        %v633 = vld [vmem:[#allocation10 + $0x84] sm:$0xff]
        %v634 = vld [vmem:[#allocation10 + $0x8c] sm:$0xf]
        %v635 = vld [vmem:[#allocation10 + $0x90] sm:$0xff]
        %v636 = vld [vmem:[#allocation10 + $0x98] sm:$0xf]
        %v637 = vld [vmem:[#allocation10 + $0x9c] sm:$0xff]
        %v638 = vld [vmem:[#allocation10 + $0xa4] sm:$0xf]
        %v639 = vld [vmem:[#allocation10 + $0xa8] sm:$0xff]
        %v640 = vld [vmem:[#allocation10 + $0xb0] sm:$0xf]
        %v641 = vld [vmem:[#allocation10 + $0xb4] sm:$0xff]
        %v642 = vld [vmem:[#allocation10 + $0xbc] sm:$0xf]
        %v643 = vld [vmem:[%s5] sm:$0x7]
        %v645 = vlaneseq
        %v646 = vshrl.u32 %v645, 7
        %v647 = vsub.s32 0, %v646
        %v648 = vrot.slane %v643, %v647
        %v649 = vlaneseq
        %v650 = vshrl.u32 %v649, 7
        %v651 = vsub.s32 1, %v650
        %v652 = vrot.slane %v643, %v651
        %v653 = vlaneseq
        %v654 = vshrl.u32 %v653, 7
        %v655 = vsub.s32 2, %v654
        %v656 = vrot.slane %v643, %v655
        %v692 = vunpack.c.l.b16 %v611
        %v693 = vunpack.c.h.b16 %v611
        %v694 = vunpack.c.l.b16 %v612
        %v695 = vunpack.c.l.b16 %v613
        %v696 = vunpack.c.h.b16 %v613
        %v697 = vunpack.c.l.b16 %v614
        %v698 = vunpack.c.l.b16 %v615
        %v699 = vunpack.c.h.b16 %v615
        %v700 = vunpack.c.l.b16 %v616
        %v701 = vunpack.c.l.b16 %v617
        %v702 = vunpack.c.h.b16 %v617
        %v703 = vunpack.c.l.b16 %v618
        %v704 = vunpack.c.l.b16 %v619
        %v705 = vunpack.c.h.b16 %v619
        %v706 = vunpack.c.l.b16 %v620
        %v707 = vunpack.c.l.b16 %v621
        %v708 = vunpack.c.h.b16 %v621
        %v709 = vunpack.c.l.b16 %v622
        %v710 = vunpack.c.l.b16 %v623
        %v711 = vunpack.c.h.b16 %v623
        %v712 = vunpack.c.l.b16 %v624
        %v713 = vunpack.c.l.b16 %v625
        %v714 = vunpack.c.h.b16 %v625
        %v715 = vunpack.c.l.b16 %v626
        %v716 = vunpack.c.l.b16 %v627
        %v717 = vunpack.c.h.b16 %v627
        %v718 = vunpack.c.l.b16 %v628
        %v719 = vunpack.c.l.b16 %v629
        %v720 = vunpack.c.h.b16 %v629
        %v721 = vunpack.c.l.b16 %v630
        %v722 = vunpack.c.l.b16 %v631
        %v723 = vunpack.c.h.b16 %v631
        %v724 = vunpack.c.l.b16 %v632
        %v725 = vunpack.c.l.b16 %v633
        %v726 = vunpack.c.h.b16 %v633
        %v727 = vunpack.c.l.b16 %v634
        %v728 = vunpack.c.l.b16 %v635
        %v729 = vunpack.c.h.b16 %v635
        %v730 = vunpack.c.l.b16 %v636
        %v731 = vunpack.c.l.b16 %v637
        %v732 = vunpack.c.h.b16 %v637
        %v733 = vunpack.c.l.b16 %v638
        %v734 = vunpack.c.l.b16 %v639
        %v735 = vunpack.c.h.b16 %v639
        %v736 = vunpack.c.l.b16 %v640
        %v737 = vunpack.c.l.b16 %v641
        %v738 = vunpack.c.h.b16 %v641
        %v739 = vunpack.c.l.b16 %v642
        %v740 = vpack.c.b16 %v695, %v692
        %v741 = vpack.c.b16 %v696, %v693
        %v742 = vpack.c.b16 %v697, %v694
        %v743 = vpack.c.b16 %v701, %v698
        %v744 = vpack.c.b16 %v702, %v699
        %v745 = vpack.c.b16 %v703, %v700
        %v746 = vpack.c.b16 %v707, %v704
        %v747 = vpack.c.b16 %v708, %v705
        %v748 = vpack.c.b16 %v709, %v706
        %v749 = vpack.c.b16 %v713, %v710
        %v750 = vpack.c.b16 %v714, %v711
        %v751 = vpack.c.b16 %v715, %v712
        %v752 = vpack.c.b16 %v719, %v716
        %v753 = vpack.c.b16 %v720, %v717
        %v754 = vpack.c.b16 %v721, %v718
        %v755 = vpack.c.b16 %v725, %v722
        %v756 = vpack.c.b16 %v726, %v723
        %v757 = vpack.c.b16 %v727, %v724
        %v758 = vpack.c.b16 %v731, %v728
        %v759 = vpack.c.b16 %v732, %v729
        %v760 = vpack.c.b16 %v733, %v730
        %v761 = vpack.c.b16 %v737, %v734
        %v762 = vpack.c.b16 %v738, %v735
        %v763 = vpack.c.b16 %v739, %v736
        %788 = vmatprep.subr.bf16.mxu0 %v762
        %789 = vmatpush1.bf16.msra.mxu0 %v761
        %790 = vmatprep.subr.bf16.mxu0 %v759
        %791 = vmatpush1.bf16.msra.mxu0 %v758
        %792 = vmatprep.subr.bf16.mxu0 %v756
        %793 = vmatpush1.bf16.msra.mxu0 %v755
        %794 = vmatprep.subr.bf16.mxu0 %v753
        %795 = vmatpush1.bf16.msra.mxu0 %v752
        %796 = vmatprep.subr.bf16.mxu0 %v750
        %797 = vmatpush1.bf16.msra.mxu0 %v749
        %798 = vmatprep.subr.bf16.mxu0 %v747
        %799 = vmatpush1.bf16.msra.mxu0 %v746
        %800 = vmatprep.subr.bf16.mxu0 %v744
        %801 = vmatpush1.bf16.msra.mxu0 %v743
        %802 = vmatprep.subr.bf16.mxu0 %v741
        %803 = vmatpush1.bf16.msra.mxu0 %v740
        %804 = vmatprep.subr.bf16.mxu0 0
        %805 = vmatpush2.bf16.msra.mxu0 0
        %806 = vmatprep.subr.bf16.mxu0 0
        %807 = vmatpush2.bf16.msra.mxu0 0
        %808 = vmatprep.subr.bf16.mxu0 0
        %809 = vmatpush2.bf16.msra.mxu0 0
        %810 = vmatprep.subr.bf16.mxu0 0
        %811 = vmatpush2.bf16.msra.mxu0 0
        %812 = vmatprep.subr.bf16.mxu0 0
        %813 = vmatpush2.bf16.msra.mxu0 0
        %814 = vmatprep.subr.bf16.mxu0 0
        %815 = vmatpush2.bf16.msra.mxu0 0
        %816 = vmatprep.subr.bf16.mxu0 0
        %817 = vmatpush2.bf16.msra.mxu0 0
        %818 = vmatprep.subr.bf16.mxu0 0
        %819 = vmatpush2.bf16.msra.mxu0 0
        %820 = vmatprep.mubr.bf16.mxu0 0
        %821 = vmatmul.mubr.bf16.gmra.mxu0 %v610
        %v822 = vpop.f32.mrf.mxu0
        %v823 = vadd.f32 %v648, %v822
        %v824 = vpop.f32.mrf.mxu0
        %v825 = vadd.f32 %v652, %v824
        %v826 = vpop.f32.mrf.mxu0
        %v827 = vpop.f32.mrf.mxu0
        %828 = vdwg.mxu0
        %829 = vmatprep.subr.bf16.mxu0 0
        %830 = vmatpush1.bf16.msra.mxu0 %v763
        %831 = vmatprep.subr.bf16.mxu0 0
        %832 = vmatpush1.bf16.msra.mxu0 %v760
        %833 = vmatprep.subr.bf16.mxu0 0
        %834 = vmatpush1.bf16.msra.mxu0 %v757
        %835 = vmatprep.subr.bf16.mxu0 0
        %836 = vmatpush1.bf16.msra.mxu0 %v754
        %837 = vmatprep.subr.bf16.mxu0 0
        %838 = vmatpush1.bf16.msra.mxu0 %v751
        %839 = vmatprep.subr.bf16.mxu0 0
        %840 = vmatpush1.bf16.msra.mxu0 %v748
        %841 = vmatprep.subr.bf16.mxu0 0
        %842 = vmatpush1.bf16.msra.mxu0 %v745
        %843 = vmatprep.subr.bf16.mxu0 0
        %844 = vmatpush1.bf16.msra.mxu0 %v742
        %845 = vmatprep.subr.bf16.mxu0 0
        %846 = vmatpush2.bf16.msra.mxu0 0
        %847 = vmatprep.subr.bf16.mxu0 0
        %848 = vmatpush2.bf16.msra.mxu0 0
        %849 = vmatprep.subr.bf16.mxu0 0
        %850 = vmatpush2.bf16.msra.mxu0 0
        %851 = vmatprep.subr.bf16.mxu0 0
        %852 = vmatpush2.bf16.msra.mxu0 0
        %853 = vmatprep.subr.bf16.mxu0 0
        %854 = vmatpush2.bf16.msra.mxu0 0
        %855 = vmatprep.subr.bf16.mxu0 0
        %856 = vmatpush2.bf16.msra.mxu0 0
        %857 = vmatprep.subr.bf16.mxu0 0
        %858 = vmatpush2.bf16.msra.mxu0 0
        %859 = vmatprep.subr.bf16.mxu0 0
        %860 = vmatpush2.bf16.msra.mxu0 0
        %861 = vmatprep.mubr.bf16.mxu0 0
        %862 = vmatmul.mubr.bf16.gmra.mxu0 %v610
        %v863 = vpop.f32.mrf.mxu0
        %v864 = vadd.f32 %v656, %v863
        %v865 = vpop.f32.mrf.mxu0
        %v866 = vpop.f32.mrf.mxu0
        %v867 = vpop.f32.mrf.mxu0
        %868 = vdwg.mxu0
        %v869 = vpack.c.bf16 %v823, %v823
        %v870 = vpack.c.bf16 %v825, %v825
        %v871 = vpack.c.bf16 %v864, %v864
        %873 = vrot.lane.b32.xlu0 %v869, 64
        %v874 = vpop.permute.xlu0 %873
        %876 = vrot.lane.b32.xlu0 %v870, 64
        %v877 = vpop.permute.xlu0 %876
        %879 = vrot.lane.b32.xlu0 %v871, 64
        %v880 = vpop.permute.xlu0 %879
        %vm881 = vcmask 523264
        %v883 = vsel %vm881, %v869, 0
        %v886 = vsel %vm881, %v870, 0
        %888 = vmatprep.subr.bf16.mxu0 0
        %889 = vmatpush1.bf16.xpose.msra.mxu0 0
        %890 = vmatprep.subr.bf16.mxu0 0
        %891 = vmatpush1.bf16.xpose.msra.mxu0 0
        %892 = vmatprep.subr.bf16.mxu0 0
        %893 = vmatpush1.bf16.xpose.msra.mxu0 0
        %894 = vmatprep.subr.bf16.mxu0 0
        %895 = vmatpush1.bf16.xpose.msra.mxu0 0
        %896 = vmatprep.subr.bf16.mxu0 0
        %897 = vmatpush1.bf16.xpose.msra.mxu0 0
        %898 = vmatprep.subr.bf16.mxu0 0
        %899 = vmatpush1.bf16.xpose.msra.mxu0 0
        %900 = vmatprep.subr.bf16.mxu0 0
        %901 = vmatpush1.bf16.xpose.msra.mxu0 0
        %902 = vmatprep.subr.bf16.mxu0 0
        %903 = vmatpush1.bf16.xpose.msra.mxu0 %v886
        %904 = vmatprep.subr.bf16.mxu0 0
        %905 = vmatpush2.bf16.xpose.msra.mxu0 0
        %906 = vmatprep.subr.bf16.mxu0 0
        %907 = vmatpush2.bf16.xpose.msra.mxu0 0
        %908 = vmatprep.subr.bf16.mxu0 0
        %909 = vmatpush2.bf16.xpose.msra.mxu0 0
        %910 = vmatprep.subr.bf16.mxu0 0
        %911 = vmatpush2.bf16.xpose.msra.mxu0 0
        %912 = vmatprep.subr.bf16.mxu0 0
        %913 = vmatpush2.bf16.xpose.msra.mxu0 0
        %914 = vmatprep.subr.bf16.mxu0 0
        %915 = vmatpush2.bf16.xpose.msra.mxu0 0
        %916 = vmatprep.subr.bf16.mxu0 0
        %917 = vmatpush2.bf16.xpose.msra.mxu0 0
        %918 = vmatprep.subr.bf16.mxu0 0
        %919 = vmatpush2.bf16.xpose.msra.mxu0 0
        %920 = vmatprep.mubr.bf16.mxu0 0
        %921 = vmatmul.mubr.bf16.gmra.mxu0 %v883
        %v922 = vpop.f32.mrf.mxu0
        %v923 = vadd.f32 0.0, %v922
        %v924 = vpop.f32.mrf.mxu0
        %v925 = vpop.f32.mrf.mxu0
        %v926 = vpop.f32.mrf.mxu0
        %927 = vdwg.mxu0
        %v929 = vsel %vm881, %v874, 0
        %v932 = vsel %vm881, %v877, 0
        %934 = vmatprep.subr.bf16.mxu0 0
        %935 = vmatpush1.bf16.xpose.msra.mxu0 0
        %936 = vmatprep.subr.bf16.mxu0 0
        %937 = vmatpush1.bf16.xpose.msra.mxu0 0
        %938 = vmatprep.subr.bf16.mxu0 0
        %939 = vmatpush1.bf16.xpose.msra.mxu0 0
        %940 = vmatprep.subr.bf16.mxu0 0
        %941 = vmatpush1.bf16.xpose.msra.mxu0 0
        %942 = vmatprep.subr.bf16.mxu0 0
        %943 = vmatpush1.bf16.xpose.msra.mxu0 0
        %944 = vmatprep.subr.bf16.mxu0 0
        %945 = vmatpush1.bf16.xpose.msra.mxu0 0
        %946 = vmatprep.subr.bf16.mxu0 0
        %947 = vmatpush1.bf16.xpose.msra.mxu0 0
        %948 = vmatprep.subr.bf16.mxu0 0
        %949 = vmatpush1.bf16.xpose.msra.mxu0 %v932
        %950 = vmatprep.subr.bf16.mxu0 0
        %951 = vmatpush2.bf16.xpose.msra.mxu0 0
        %952 = vmatprep.subr.bf16.mxu0 0
        %953 = vmatpush2.bf16.xpose.msra.mxu0 0
        %954 = vmatprep.subr.bf16.mxu0 0
        %955 = vmatpush2.bf16.xpose.msra.mxu0 0
        %956 = vmatprep.subr.bf16.mxu0 0
        %957 = vmatpush2.bf16.xpose.msra.mxu0 0
        %958 = vmatprep.subr.bf16.mxu0 0
        %959 = vmatpush2.bf16.xpose.msra.mxu0 0
        %960 = vmatprep.subr.bf16.mxu0 0
        %961 = vmatpush2.bf16.xpose.msra.mxu0 0
        %962 = vmatprep.subr.bf16.mxu0 0
        %963 = vmatpush2.bf16.xpose.msra.mxu0 0
        %964 = vmatprep.subr.bf16.mxu0 0
        %965 = vmatpush2.bf16.xpose.msra.mxu0 0
        %966 = vmatprep.mubr.bf16.mxu0 0
        %967 = vmatmul.mubr.bf16.gmra.mxu0 %v929
        %v968 = vpop.f32.mrf.mxu0
        %v969 = vadd.f32 0.0, %v968
        %v970 = vpop.f32.mrf.mxu0
        %v971 = vpop.f32.mrf.mxu0
        %v972 = vpop.f32.mrf.mxu0
        %973 = vdwg.mxu0
        %vm974 = vcmask 64512
        %v975 = vsel %vm974, %v923, -inf
        %976 = vmax.xlane.f32.xlu0 %v975
        %v977 = vpop.xlane.xlu0 %976
        %v978 = vsel %vm974, %v969, -inf
        %979 = vmax.xlane.f32.xlu0 %v978
        %v980 = vpop.xlane.xlu0 %979
        %v981 = vsub.f32 %v923, %v977
        %v982 = vsub.f32 %v969, %v980
        %v983 = vmul.f32 %v981, 1.442695
        %v984 = vpow.pop %v983
        %v985 = vmul.f32 %v982, 1.442695
        %v986 = vpow.pop %v985
        %v987 = vsel %vm974, %v984, 0.0
        %988 = vadd.xlane.f32.xlu0 %v987
        %v989 = vpop.xlane.xlu0 %988
        %v990 = vsel %vm974, %v986, 0.0
        %991 = vadd.xlane.f32.xlu0 %v990
        %v992 = vpop.xlane.xlu0 %991
        %v993 = vrcp.pop %v989
        %v994 = vrcp.pop %v992
        %v995 = vmul.f32 %v984, %v993
        %v996 = vmul.f32 %v986, %v994
        %v997 = vpack.c.bf16 %v995, %v995
        %v998 = vpack.c.bf16 %v996, %v996
        %v1000 = vsel %vm974, %v997, 0
        %vm1002 = vcmask 1043456
        %v1004 = vsel %vm1002, %v871, 0
        %1006 = vmatprep.subr.bf16.mxu0 0
        %1007 = vmatpush1.bf16.msra.mxu0 0
        %1008 = vmatprep.subr.bf16.mxu0 0
        %1009 = vmatpush1.bf16.msra.mxu0 0
        %1010 = vmatprep.subr.bf16.mxu0 0
        %1011 = vmatpush1.bf16.msra.mxu0 0
        %1012 = vmatprep.subr.bf16.mxu0 0
        %1013 = vmatpush1.bf16.msra.mxu0 0
        %1014 = vmatprep.subr.bf16.mxu0 0
        %1015 = vmatpush1.bf16.msra.mxu0 0
        %1016 = vmatprep.subr.bf16.mxu0 0
        %1017 = vmatpush1.bf16.msra.mxu0 0
        %1018 = vmatprep.subr.bf16.mxu0 0
        %1019 = vmatpush1.bf16.msra.mxu0 0
        %1020 = vmatprep.subr.bf16.mxu0 0
        %1021 = vmatpush1.bf16.msra.mxu0 %v1004
        %1022 = vmatprep.subr.bf16.mxu0 0
        %1023 = vmatpush2.bf16.msra.mxu0 0
        %1024 = vmatprep.subr.bf16.mxu0 0
        %1025 = vmatpush2.bf16.msra.mxu0 0
        %1026 = vmatprep.subr.bf16.mxu0 0
        %1027 = vmatpush2.bf16.msra.mxu0 0
        %1028 = vmatprep.subr.bf16.mxu0 0
        %1029 = vmatpush2.bf16.msra.mxu0 0
        %1030 = vmatprep.subr.bf16.mxu0 0
        %1031 = vmatpush2.bf16.msra.mxu0 0
        %1032 = vmatprep.subr.bf16.mxu0 0
        %1033 = vmatpush2.bf16.msra.mxu0 0
        %1034 = vmatprep.subr.bf16.mxu0 0
        %1035 = vmatpush2.bf16.msra.mxu0 0
        %1036 = vmatprep.subr.bf16.mxu0 0
        %1037 = vmatpush2.bf16.msra.mxu0 0
        %1038 = vmatprep.mubr.bf16.mxu0 0
        %1039 = vmatmul.mubr.bf16.gmra.mxu0 %v1000
        %v1040 = vpop.f32.mrf.mxu0
        %v1041 = vadd.f32 0.0, %v1040
        %v1042 = vpop.f32.mrf.mxu0
        %v1043 = vpop.f32.mrf.mxu0
        %v1044 = vpop.f32.mrf.mxu0
        %1045 = vdwg.mxu0
        %v1047 = vsel %vm974, %v998, 0
        %v1050 = vsel %vm1002, %v880, 0
        %1052 = vmatprep.subr.bf16.mxu0 0
        %1053 = vmatpush1.bf16.msra.mxu0 0
        %1054 = vmatprep.subr.bf16.mxu0 0
        %1055 = vmatpush1.bf16.msra.mxu0 0
        %1056 = vmatprep.subr.bf16.mxu0 0
        %1057 = vmatpush1.bf16.msra.mxu0 0
        %1058 = vmatprep.subr.bf16.mxu0 0
        %1059 = vmatpush1.bf16.msra.mxu0 0
        %1060 = vmatprep.subr.bf16.mxu0 0
        %1061 = vmatpush1.bf16.msra.mxu0 0
        %1062 = vmatprep.subr.bf16.mxu0 0
        %1063 = vmatpush1.bf16.msra.mxu0 0
        %1064 = vmatprep.subr.bf16.mxu0 0
        %1065 = vmatpush1.bf16.msra.mxu0 0
        %1066 = vmatprep.subr.bf16.mxu0 0
        %1067 = vmatpush1.bf16.msra.mxu0 %v1050
        %1068 = vmatprep.subr.bf16.mxu0 0
        %1069 = vmatpush2.bf16.msra.mxu0 0
        %1070 = vmatprep.subr.bf16.mxu0 0
        %1071 = vmatpush2.bf16.msra.mxu0 0
        %1072 = vmatprep.subr.bf16.mxu0 0
        %1073 = vmatpush2.bf16.msra.mxu0 0
        %1074 = vmatprep.subr.bf16.mxu0 0
        %1075 = vmatpush2.bf16.msra.mxu0 0
        %1076 = vmatprep.subr.bf16.mxu0 0
        %1077 = vmatpush2.bf16.msra.mxu0 0
        %1078 = vmatprep.subr.bf16.mxu0 0
        %1079 = vmatpush2.bf16.msra.mxu0 0
        %1080 = vmatprep.subr.bf16.mxu0 0
        %1081 = vmatpush2.bf16.msra.mxu0 0
        %1082 = vmatprep.subr.bf16.mxu0 0
        %1083 = vmatpush2.bf16.msra.mxu0 0
        %1084 = vmatprep.mubr.bf16.mxu0 0
        %1085 = vmatmul.mubr.bf16.gmra.mxu0 %v1047
        %v1086 = vpop.f32.mrf.mxu0
        %v1087 = vadd.f32 0.0, %v1086
        %v1088 = vpop.f32.mrf.mxu0
        %v1089 = vpop.f32.mrf.mxu0
        %v1090 = vpop.f32.mrf.mxu0
        %1091 = vdwg.mxu0
        %1093 = vrot.lane.b32.xlu0 %v1087, 64
        %v1094 = vpop.permute.xlu0 %1093
        %v1096 = vsel %vm881, %v1041, %v1094
        %v1097 = vpack.c.bf16 %v1096, %v1096
        %v1098 = vld [vmem:[#allocation11] sm:$0xf]
        %v1099 = vld [vmem:[#allocation11 + $0x4] sm:$0xf]
        %v1100 = vld [vmem:[#allocation11 + $0x8] sm:$0xf]
        %v1101 = vld [vmem:[#allocation11 + $0xc] sm:$0xf]
        %v1102 = vld [vmem:[#allocation11 + $0x10] sm:$0xf]
        %v1103 = vld [vmem:[#allocation11 + $0x14] sm:$0xf]
        %v1104 = vld [vmem:[#allocation11 + $0x18] sm:$0xf]
        %v1105 = vld [vmem:[#allocation11 + $0x1c] sm:$0xf]
        %v1106 = vld [vmem:[#allocation11 + $0x20] sm:$0xf]
        %v1107 = vld [vmem:[#allocation11 + $0x24] sm:$0xf]
        %v1108 = vld [vmem:[#allocation11 + $0x28] sm:$0xf]
        %v1109 = vld [vmem:[#allocation11 + $0x2c] sm:$0xf]
        %v1110 = vld [vmem:[#allocation11 + $0x30] sm:$0xf]
        %v1111 = vld [vmem:[#allocation11 + $0x34] sm:$0xf]
        %v1112 = vld [vmem:[#allocation11 + $0x38] sm:$0xf]
        %v1113 = vld [vmem:[#allocation11 + $0x3c] sm:$0xf]
        %v1114 = vld [vmem:[%s7] sm:$0x1]
        %v1116 = vlaneseq
        %v1117 = vshrl.u32 %v1116, 7
        %v1118 = vsub.s32 0, %v1117
        %v1119 = vrot.slane %v1114, %v1118
        %v1137 = vunpack.c.l.b16 %v1098
        %v1138 = vunpack.c.l.b16 %v1099
        %v1139 = vunpack.c.l.b16 %v1100
        %v1140 = vunpack.c.l.b16 %v1101
        %v1141 = vunpack.c.l.b16 %v1102
        %v1142 = vunpack.c.l.b16 %v1103
        %v1143 = vunpack.c.l.b16 %v1104
        %v1144 = vunpack.c.l.b16 %v1105
        %v1145 = vunpack.c.l.b16 %v1106
        %v1146 = vunpack.c.l.b16 %v1107
        %v1147 = vunpack.c.l.b16 %v1108
        %v1148 = vunpack.c.l.b16 %v1109
        %v1149 = vunpack.c.l.b16 %v1110
        %v1150 = vunpack.c.l.b16 %v1111
        %v1151 = vunpack.c.l.b16 %v1112
        %v1152 = vunpack.c.l.b16 %v1113
        %v1153 = vpack.c.b16 %v1138, %v1137
        %v1154 = vpack.c.b16 %v1140, %v1139
        %v1155 = vpack.c.b16 %v1142, %v1141
        %v1156 = vpack.c.b16 %v1144, %v1143
        %v1157 = vpack.c.b16 %v1146, %v1145
        %v1158 = vpack.c.b16 %v1148, %v1147
        %v1159 = vpack.c.b16 %v1150, %v1149
        %v1160 = vpack.c.b16 %v1152, %v1151
        %1169 = vmatprep.subr.bf16.mxu0 0
        %1170 = vmatpush1.bf16.msra.mxu0 %v1160
        %1171 = vmatprep.subr.bf16.mxu0 0
        %1172 = vmatpush1.bf16.msra.mxu0 %v1159
        %1173 = vmatprep.subr.bf16.mxu0 0
        %1174 = vmatpush1.bf16.msra.mxu0 %v1158
        %1175 = vmatprep.subr.bf16.mxu0 0
        %1176 = vmatpush1.bf16.msra.mxu0 %v1157
        %1177 = vmatprep.subr.bf16.mxu0 0
        %1178 = vmatpush1.bf16.msra.mxu0 %v1156
        %1179 = vmatprep.subr.bf16.mxu0 0
        %1180 = vmatpush1.bf16.msra.mxu0 %v1155
        %1181 = vmatprep.subr.bf16.mxu0 0
        %1182 = vmatpush1.bf16.msra.mxu0 %v1154
        %1183 = vmatprep.subr.bf16.mxu0 0
        %1184 = vmatpush1.bf16.msra.mxu0 %v1153
        %1185 = vmatprep.subr.bf16.mxu0 0
        %1186 = vmatpush2.bf16.msra.mxu0 0
        %1187 = vmatprep.subr.bf16.mxu0 0
        %1188 = vmatpush2.bf16.msra.mxu0 0
        %1189 = vmatprep.subr.bf16.mxu0 0
        %1190 = vmatpush2.bf16.msra.mxu0 0
        %1191 = vmatprep.subr.bf16.mxu0 0
        %1192 = vmatpush2.bf16.msra.mxu0 0
        %1193 = vmatprep.subr.bf16.mxu0 0
        %1194 = vmatpush2.bf16.msra.mxu0 0
        %1195 = vmatprep.subr.bf16.mxu0 0
        %1196 = vmatpush2.bf16.msra.mxu0 0
        %1197 = vmatprep.subr.bf16.mxu0 0
        %1198 = vmatpush2.bf16.msra.mxu0 0
        %1199 = vmatprep.subr.bf16.mxu0 0
        %1200 = vmatpush2.bf16.msra.mxu0 0
        %1201 = vmatprep.mubr.bf16.mxu0 0
        %1202 = vmatmul.mubr.bf16.gmra.mxu0 %v1097
        %v1203 = vpop.f32.mrf.mxu0
        %v1204 = vadd.f32 %v1119, %v1203
        %v1205 = vpop.f32.mrf.mxu0
        %v1206 = vpop.f32.mrf.mxu0
        %v1207 = vpop.f32.mrf.mxu0
        %1208 = vdwg.mxu0
        %v1209 = vadd.f32 %v581, %v1204
        %v1210 = vld [vmem:[%s8] sm:$0x1]
        %v1211 = vld [vmem:[%s9] sm:$0x1]
        %1212 = vadd.xlane.f32.xlu0 %v1209
        %v1213 = vpop.xlane.xlu0 %1212
        %v1214 = vmul.f32 %v1213, %v586
        %v1215 = vsub.f32 %v1209, %v1214
        %v1216 = vmul.f32 %v1215, %v1215
        %1217 = vadd.xlane.f32.xlu0 %v1216
        %v1218 = vpop.xlane.xlu0 %1217
        %v1219 = vmul.f32 %v1218, %v586
        %v1220 = vadd.f32 %v1219, 1e-05
        %v1221 = vrsqrt.pop %v1220
        %v1222 = vmul.f32 %v1215, %v1221
        %v1224 = vlaneseq
        %v1225 = vshrl.u32 %v1224, 7
        %v1226 = vsub.s32 0, %v1225
        %v1227 = vrot.slane %v1210, %v1226
        %v1229 = vmul.f32 %v1222, %v1227
        %v1231 = vlaneseq
        %v1232 = vshrl.u32 %v1231, 7
        %v1233 = vsub.s32 0, %v1232
        %v1234 = vrot.slane %v1211, %v1233
        %v1236 = vadd.f32 %v1229, %v1234
        %v1237 = vpack.c.bf16 %v1236, %v1236
        %v1238 = vld [vmem:[#allocation13] sm:$0xff]
        %v1239 = vld [vmem:[#allocation13 + $0x8] sm:$0xff]
        %v1240 = vld [vmem:[#allocation13 + $0x10] sm:$0xff]
        %v1241 = vld [vmem:[#allocation13 + $0x18] sm:$0xff]
        %v1242 = vld [vmem:[#allocation13 + $0x20] sm:$0xff]
        %v1243 = vld [vmem:[#allocation13 + $0x28] sm:$0xff]
        %v1244 = vld [vmem:[#allocation13 + $0x30] sm:$0xff]
        %v1245 = vld [vmem:[#allocation13 + $0x38] sm:$0xff]
        %v1246 = vld [vmem:[#allocation13 + $0x40] sm:$0xff]
        %v1247 = vld [vmem:[#allocation13 + $0x48] sm:$0xff]
        %v1248 = vld [vmem:[#allocation13 + $0x50] sm:$0xff]
        %v1249 = vld [vmem:[#allocation13 + $0x58] sm:$0xff]
        %v1250 = vld [vmem:[#allocation13 + $0x60] sm:$0xff]
        %v1251 = vld [vmem:[#allocation13 + $0x68] sm:$0xff]
        %v1252 = vld [vmem:[#allocation13 + $0x70] sm:$0xff]
        %v1253 = vld [vmem:[#allocation13 + $0x78] sm:$0xff]
        %v1254 = vld [vmem:[#allocation13 + $0x80] sm:$0xff]
        %v1255 = vld [vmem:[#allocation13 + $0x88] sm:$0xff]
        %v1256 = vld [vmem:[#allocation13 + $0x90] sm:$0xff]
        %v1257 = vld [vmem:[#allocation13 + $0x98] sm:$0xff]
        %v1258 = vld [vmem:[#allocation13 + $0xa0] sm:$0xff]
        %v1259 = vld [vmem:[#allocation13 + $0xa8] sm:$0xff]
        %v1260 = vld [vmem:[#allocation13 + $0xb0] sm:$0xff]
        %v1261 = vld [vmem:[#allocation13 + $0xb8] sm:$0xff]
        %v1262 = vld [vmem:[#allocation13 + $0xc0] sm:$0xff]
        %v1263 = vld [vmem:[#allocation13 + $0xc8] sm:$0xff]
        %v1264 = vld [vmem:[#allocation13 + $0xd0] sm:$0xff]
        %v1265 = vld [vmem:[#allocation13 + $0xd8] sm:$0xff]
        %v1266 = vld [vmem:[#allocation13 + $0xe0] sm:$0xff]
        %v1267 = vld [vmem:[#allocation13 + $0xe8] sm:$0xff]
        %v1268 = vld [vmem:[#allocation13 + $0xf0] sm:$0xff]
        %v1269 = vld [vmem:[#allocation13 + $0xf8] sm:$0xff]
        %v1270 = vld [vmem:[%s11] sm:$0xf]
        %v1272 = vlaneseq
        %v1273 = vshrl.u32 %v1272, 7
        %v1274 = vsub.s32 0, %v1273
        %v1275 = vrot.slane %v1270, %v1274
        %v1276 = vlaneseq
        %v1277 = vshrl.u32 %v1276, 7
        %v1278 = vsub.s32 1, %v1277
        %v1279 = vrot.slane %v1270, %v1278
        %v1280 = vlaneseq
        %v1281 = vshrl.u32 %v1280, 7
        %v1282 = vsub.s32 2, %v1281
        %v1283 = vrot.slane %v1270, %v1282
        %v1284 = vlaneseq
        %v1285 = vshrl.u32 %v1284, 7
        %v1286 = vsub.s32 3, %v1285
        %v1287 = vrot.slane %v1270, %v1286
        %v1324 = vunpack.c.l.b16 %v1238
        %v1325 = vunpack.c.h.b16 %v1238
        %v1326 = vunpack.c.l.b16 %v1239
        %v1327 = vunpack.c.h.b16 %v1239
        %v1328 = vunpack.c.l.b16 %v1240
        %v1329 = vunpack.c.h.b16 %v1240
        %v1330 = vunpack.c.l.b16 %v1241
        %v1331 = vunpack.c.h.b16 %v1241
        %v1332 = vunpack.c.l.b16 %v1242
        %v1333 = vunpack.c.h.b16 %v1242
        %v1334 = vunpack.c.l.b16 %v1243
        %v1335 = vunpack.c.h.b16 %v1243
        %v1336 = vunpack.c.l.b16 %v1244
        %v1337 = vunpack.c.h.b16 %v1244
        %v1338 = vunpack.c.l.b16 %v1245
        %v1339 = vunpack.c.h.b16 %v1245
        %v1340 = vunpack.c.l.b16 %v1246
        %v1341 = vunpack.c.h.b16 %v1246
        %v1342 = vunpack.c.l.b16 %v1247
        %v1343 = vunpack.c.h.b16 %v1247
        %v1344 = vunpack.c.l.b16 %v1248
        %v1345 = vunpack.c.h.b16 %v1248
        %v1346 = vunpack.c.l.b16 %v1249
        %v1347 = vunpack.c.h.b16 %v1249
        %v1348 = vunpack.c.l.b16 %v1250
        %v1349 = vunpack.c.h.b16 %v1250
        %v1350 = vunpack.c.l.b16 %v1251
        %v1351 = vunpack.c.h.b16 %v1251
        %v1352 = vunpack.c.l.b16 %v1252
        %v1353 = vunpack.c.h.b16 %v1252
        %v1354 = vunpack.c.l.b16 %v1253
        %v1355 = vunpack.c.h.b16 %v1253
        %v1356 = vunpack.c.l.b16 %v1254
        %v1357 = vunpack.c.h.b16 %v1254
        %v1358 = vunpack.c.l.b16 %v1255
        %v1359 = vunpack.c.h.b16 %v1255
        %v1360 = vunpack.c.l.b16 %v1256
        %v1361 = vunpack.c.h.b16 %v1256
        %v1362 = vunpack.c.l.b16 %v1257
        %v1363 = vunpack.c.h.b16 %v1257
        %v1364 = vunpack.c.l.b16 %v1258
        %v1365 = vunpack.c.h.b16 %v1258
        %v1366 = vunpack.c.l.b16 %v1259
        %v1367 = vunpack.c.h.b16 %v1259
        %v1368 = vunpack.c.l.b16 %v1260
        %v1369 = vunpack.c.h.b16 %v1260
        %v1370 = vunpack.c.l.b16 %v1261
        %v1371 = vunpack.c.h.b16 %v1261
        %v1372 = vunpack.c.l.b16 %v1262
        %v1373 = vunpack.c.h.b16 %v1262
        %v1374 = vunpack.c.l.b16 %v1263
        %v1375 = vunpack.c.h.b16 %v1263
        %v1376 = vunpack.c.l.b16 %v1264
        %v1377 = vunpack.c.h.b16 %v1264
        %v1378 = vunpack.c.l.b16 %v1265
        %v1379 = vunpack.c.h.b16 %v1265
        %v1380 = vunpack.c.l.b16 %v1266
        %v1381 = vunpack.c.h.b16 %v1266
        %v1382 = vunpack.c.l.b16 %v1267
        %v1383 = vunpack.c.h.b16 %v1267
        %v1384 = vunpack.c.l.b16 %v1268
        %v1385 = vunpack.c.h.b16 %v1268
        %v1386 = vunpack.c.l.b16 %v1269
        %v1387 = vunpack.c.h.b16 %v1269
        %v1388 = vpack.c.b16 %v1328, %v1324
        %v1389 = vpack.c.b16 %v1329, %v1325
        %v1390 = vpack.c.b16 %v1330, %v1326
        %v1391 = vpack.c.b16 %v1331, %v1327
        %v1392 = vpack.c.b16 %v1336, %v1332
        %v1393 = vpack.c.b16 %v1337, %v1333
        %v1394 = vpack.c.b16 %v1338, %v1334
        %v1395 = vpack.c.b16 %v1339, %v1335
        %v1396 = vpack.c.b16 %v1344, %v1340
        %v1397 = vpack.c.b16 %v1345, %v1341
        %v1398 = vpack.c.b16 %v1346, %v1342
        %v1399 = vpack.c.b16 %v1347, %v1343
        %v1400 = vpack.c.b16 %v1352, %v1348
        %v1401 = vpack.c.b16 %v1353, %v1349
        %v1402 = vpack.c.b16 %v1354, %v1350
        %v1403 = vpack.c.b16 %v1355, %v1351
        %v1404 = vpack.c.b16 %v1360, %v1356
        %v1405 = vpack.c.b16 %v1361, %v1357
        %v1406 = vpack.c.b16 %v1362, %v1358
        %v1407 = vpack.c.b16 %v1363, %v1359
        %v1408 = vpack.c.b16 %v1368, %v1364
        %v1409 = vpack.c.b16 %v1369, %v1365
        %v1410 = vpack.c.b16 %v1370, %v1366
        %v1411 = vpack.c.b16 %v1371, %v1367
        %v1412 = vpack.c.b16 %v1376, %v1372
        %v1413 = vpack.c.b16 %v1377, %v1373
        %v1414 = vpack.c.b16 %v1378, %v1374
        %v1415 = vpack.c.b16 %v1379, %v1375
        %v1416 = vpack.c.b16 %v1384, %v1380
        %v1417 = vpack.c.b16 %v1385, %v1381
        %v1418 = vpack.c.b16 %v1386, %v1382
        %v1419 = vpack.c.b16 %v1387, %v1383
        %1452 = vmatprep.subr.bf16.mxu0 %v1417
        %1453 = vmatpush1.bf16.msra.mxu0 %v1416
        %1454 = vmatprep.subr.bf16.mxu0 %v1413
        %1455 = vmatpush1.bf16.msra.mxu0 %v1412
        %1456 = vmatprep.subr.bf16.mxu0 %v1409
        %1457 = vmatpush1.bf16.msra.mxu0 %v1408
        %1458 = vmatprep.subr.bf16.mxu0 %v1405
        %1459 = vmatpush1.bf16.msra.mxu0 %v1404
        %1460 = vmatprep.subr.bf16.mxu0 %v1401
        %1461 = vmatpush1.bf16.msra.mxu0 %v1400
        %1462 = vmatprep.subr.bf16.mxu0 %v1397
        %1463 = vmatpush1.bf16.msra.mxu0 %v1396
        %1464 = vmatprep.subr.bf16.mxu0 %v1393
        %1465 = vmatpush1.bf16.msra.mxu0 %v1392
        %1466 = vmatprep.subr.bf16.mxu0 %v1389
        %1467 = vmatpush1.bf16.msra.mxu0 %v1388
        %1468 = vmatprep.subr.bf16.mxu0 0
        %1469 = vmatpush2.bf16.msra.mxu0 0
        %1470 = vmatprep.subr.bf16.mxu0 0
        %1471 = vmatpush2.bf16.msra.mxu0 0
        %1472 = vmatprep.subr.bf16.mxu0 0
        %1473 = vmatpush2.bf16.msra.mxu0 0
        %1474 = vmatprep.subr.bf16.mxu0 0
        %1475 = vmatpush2.bf16.msra.mxu0 0
        %1476 = vmatprep.subr.bf16.mxu0 0
        %1477 = vmatpush2.bf16.msra.mxu0 0
        %1478 = vmatprep.subr.bf16.mxu0 0
        %1479 = vmatpush2.bf16.msra.mxu0 0
        %1480 = vmatprep.subr.bf16.mxu0 0
        %1481 = vmatpush2.bf16.msra.mxu0 0
        %1482 = vmatprep.subr.bf16.mxu0 0
        %1483 = vmatpush2.bf16.msra.mxu0 0
        %1484 = vmatprep.mubr.bf16.mxu0 0
        %1485 = vmatmul.mubr.bf16.gmra.mxu0 %v1237
        %v1486 = vpop.f32.mrf.mxu0
        %v1487 = vadd.f32 %v1275, %v1486
        %v1488 = vpop.f32.mrf.mxu0
        %v1489 = vadd.f32 %v1279, %v1488
        %v1490 = vpop.f32.mrf.mxu0
        %v1491 = vpop.f32.mrf.mxu0
        %1492 = vdwg.mxu0
        %1493 = vmatprep.subr.bf16.mxu0 %v1419
        %1494 = vmatpush1.bf16.msra.mxu0 %v1418
        %1495 = vmatprep.subr.bf16.mxu0 %v1415
        %1496 = vmatpush1.bf16.msra.mxu0 %v1414
        %1497 = vmatprep.subr.bf16.mxu0 %v1411
        %1498 = vmatpush1.bf16.msra.mxu0 %v1410
        %1499 = vmatprep.subr.bf16.mxu0 %v1407
        %1500 = vmatpush1.bf16.msra.mxu0 %v1406
        %1501 = vmatprep.subr.bf16.mxu0 %v1403
        %1502 = vmatpush1.bf16.msra.mxu0 %v1402
        %1503 = vmatprep.subr.bf16.mxu0 %v1399
        %1504 = vmatpush1.bf16.msra.mxu0 %v1398
        %1505 = vmatprep.subr.bf16.mxu0 %v1395
        %1506 = vmatpush1.bf16.msra.mxu0 %v1394
        %1507 = vmatprep.subr.bf16.mxu0 %v1391
        %1508 = vmatpush1.bf16.msra.mxu0 %v1390
        %1509 = vmatprep.subr.bf16.mxu0 0
        %1510 = vmatpush2.bf16.msra.mxu0 0
        %1511 = vmatprep.subr.bf16.mxu0 0
        %1512 = vmatpush2.bf16.msra.mxu0 0
        %1513 = vmatprep.subr.bf16.mxu0 0
        %1514 = vmatpush2.bf16.msra.mxu0 0
        %1515 = vmatprep.subr.bf16.mxu0 0
        %1516 = vmatpush2.bf16.msra.mxu0 0
        %1517 = vmatprep.subr.bf16.mxu0 0
        %1518 = vmatpush2.bf16.msra.mxu0 0
        %1519 = vmatprep.subr.bf16.mxu0 0
        %1520 = vmatpush2.bf16.msra.mxu0 0
        %1521 = vmatprep.subr.bf16.mxu0 0
        %1522 = vmatpush2.bf16.msra.mxu0 0
        %1523 = vmatprep.subr.bf16.mxu0 0
        %1524 = vmatpush2.bf16.msra.mxu0 0
        %1525 = vmatprep.mubr.bf16.mxu0 0
        %1526 = vmatmul.mubr.bf16.gmra.mxu0 %v1237
        %v1527 = vpop.f32.mrf.mxu0
        %v1528 = vadd.f32 %v1283, %v1527
        %v1529 = vpop.f32.mrf.mxu0
        %v1530 = vadd.f32 %v1287, %v1529
        %v1531 = vpop.f32.mrf.mxu0
        %v1532 = vpop.f32.mrf.mxu0
        %1533 = vdwg.mxu0
        %v1534 = vmul.f32 %v1487, 1.702
        %v1535 = vmul.f32 %v1489, 1.702
        %v1536 = vmul.f32 %v1528, 1.702
        %v1537 = vmul.f32 %v1530, 1.702
        %v1538 = vxor.u32 %v1534, 2147483648
        %v1539 = vxor.u32 %v1535, 2147483648
        %v1540 = vxor.u32 %v1536, 2147483648
        %v1541 = vxor.u32 %v1537, 2147483648
        %v1542 = vmul.f32 %v1538, 1.442695
        %v1543 = vpow.pop %v1542
        %v1544 = vmul.f32 %v1539, 1.442695
        %v1545 = vpow.pop %v1544
        %v1546 = vmul.f32 %v1540, 1.442695
        %v1547 = vpow.pop %v1546
        %v1548 = vmul.f32 %v1541, 1.442695
        %v1549 = vpow.pop %v1548
        %v1550 = vadd.f32 %v1543, 1.0
        %v1551 = vadd.f32 %v1545, 1.0
        %v1552 = vadd.f32 %v1547, 1.0
        %v1553 = vadd.f32 %v1549, 1.0
        %v1554 = vrcp.pop %v1550
        %v1555 = vmul.f32 1.0, %v1554
        %v1556 = vrcp.pop %v1551
        %v1557 = vmul.f32 1.0, %v1556
        %v1558 = vrcp.pop %v1552
        %v1559 = vmul.f32 1.0, %v1558
        %v1560 = vrcp.pop %v1553
        %v1561 = vmul.f32 1.0, %v1560
        %v1562 = vmul.f32 %v1487, %v1555
        %v1563 = vmul.f32 %v1489, %v1557
        %v1564 = vmul.f32 %v1528, %v1559
        %v1565 = vmul.f32 %v1530, %v1561
        %v1566 = vpack.c.bf16 %v1562, %v1562
        %v1567 = vpack.c.bf16 %v1563, %v1563
        %v1568 = vpack.c.bf16 %v1564, %v1564
        %v1569 = vpack.c.bf16 %v1565, %v1565
        %v1570 = vld [vmem:[#allocation14] sm:$0xf]
        %v1571 = vld [vmem:[#allocation14 + $0x4] sm:$0xf]
        %v1572 = vld [vmem:[#allocation14 + $0x8] sm:$0xf]
        %v1573 = vld [vmem:[#allocation14 + $0xc] sm:$0xf]
        %v1574 = vld [vmem:[#allocation14 + $0x10] sm:$0xf]
        %v1575 = vld [vmem:[#allocation14 + $0x14] sm:$0xf]
        %v1576 = vld [vmem:[#allocation14 + $0x18] sm:$0xf]
        %v1577 = vld [vmem:[#allocation14 + $0x1c] sm:$0xf]
        %v1578 = vld [vmem:[#allocation14 + $0x20] sm:$0xf]
        %v1579 = vld [vmem:[#allocation14 + $0x24] sm:$0xf]
        %v1580 = vld [vmem:[#allocation14 + $0x28] sm:$0xf]
        %v1581 = vld [vmem:[#allocation14 + $0x2c] sm:$0xf]
        %v1582 = vld [vmem:[#allocation14 + $0x30] sm:$0xf]
        %v1583 = vld [vmem:[#allocation14 + $0x34] sm:$0xf]
        %v1584 = vld [vmem:[#allocation14 + $0x38] sm:$0xf]
        %v1585 = vld [vmem:[#allocation14 + $0x3c] sm:$0xf]
        %v1586 = vld [vmem:[#allocation14 + $0x40] sm:$0xf]
        %v1587 = vld [vmem:[#allocation14 + $0x44] sm:$0xf]
        %v1588 = vld [vmem:[#allocation14 + $0x48] sm:$0xf]
        %v1589 = vld [vmem:[#allocation14 + $0x4c] sm:$0xf]
        %v1590 = vld [vmem:[#allocation14 + $0x50] sm:$0xf]
        %v1591 = vld [vmem:[#allocation14 + $0x54] sm:$0xf]
        %v1592 = vld [vmem:[#allocation14 + $0x58] sm:$0xf]
        %v1593 = vld [vmem:[#allocation14 + $0x5c] sm:$0xf]
        %v1594 = vld [vmem:[#allocation14 + $0x60] sm:$0xf]
        %v1595 = vld [vmem:[#allocation14 + $0x64] sm:$0xf]
        %v1596 = vld [vmem:[#allocation14 + $0x68] sm:$0xf]
        %v1597 = vld [vmem:[#allocation14 + $0x6c] sm:$0xf]
        %v1598 = vld [vmem:[#allocation14 + $0x70] sm:$0xf]
        %v1599 = vld [vmem:[#allocation14 + $0x74] sm:$0xf]
        %v1600 = vld [vmem:[#allocation14 + $0x78] sm:$0xf]
        %v1601 = vld [vmem:[#allocation14 + $0x7c] sm:$0xf]
        %v1602 = vld [vmem:[#allocation14 + $0x80] sm:$0xf]
        %v1603 = vld [vmem:[#allocation14 + $0x84] sm:$0xf]
        %v1604 = vld [vmem:[#allocation14 + $0x88] sm:$0xf]
        %v1605 = vld [vmem:[#allocation14 + $0x8c] sm:$0xf]
        %v1606 = vld [vmem:[#allocation14 + $0x90] sm:$0xf]
        %v1607 = vld [vmem:[#allocation14 + $0x94] sm:$0xf]
        %v1608 = vld [vmem:[#allocation14 + $0x98] sm:$0xf]
        %v1609 = vld [vmem:[#allocation14 + $0x9c] sm:$0xf]
        %v1610 = vld [vmem:[#allocation14 + $0xa0] sm:$0xf]
        %v1611 = vld [vmem:[#allocation14 + $0xa4] sm:$0xf]
        %v1612 = vld [vmem:[#allocation14 + $0xa8] sm:$0xf]
        %v1613 = vld [vmem:[#allocation14 + $0xac] sm:$0xf]
        %v1614 = vld [vmem:[#allocation14 + $0xb0] sm:$0xf]
        %v1615 = vld [vmem:[#allocation14 + $0xb4] sm:$0xf]
        %v1616 = vld [vmem:[#allocation14 + $0xb8] sm:$0xf]
        %v1617 = vld [vmem:[#allocation14 + $0xbc] sm:$0xf]
        %v1618 = vld [vmem:[#allocation14 + $0xc0] sm:$0xf]
        %v1619 = vld [vmem:[#allocation14 + $0xc4] sm:$0xf]
        %v1620 = vld [vmem:[#allocation14 + $0xc8] sm:$0xf]
        %v1621 = vld [vmem:[#allocation14 + $0xcc] sm:$0xf]
        %v1622 = vld [vmem:[#allocation14 + $0xd0] sm:$0xf]
        %v1623 = vld [vmem:[#allocation14 + $0xd4] sm:$0xf]
        %v1624 = vld [vmem:[#allocation14 + $0xd8] sm:$0xf]
        %v1625 = vld [vmem:[#allocation14 + $0xdc] sm:$0xf]
        %v1626 = vld [vmem:[#allocation14 + $0xe0] sm:$0xf]
        %v1627 = vld [vmem:[#allocation14 + $0xe4] sm:$0xf]
        %v1628 = vld [vmem:[#allocation14 + $0xe8] sm:$0xf]
        %v1629 = vld [vmem:[#allocation14 + $0xec] sm:$0xf]
        %v1630 = vld [vmem:[#allocation14 + $0xf0] sm:$0xf]
        %v1631 = vld [vmem:[#allocation14 + $0xf4] sm:$0xf]
        %v1632 = vld [vmem:[#allocation14 + $0xf8] sm:$0xf]
        %v1633 = vld [vmem:[#allocation14 + $0xfc] sm:$0xf]
        %v1634 = vld [vmem:[%s13] sm:$0x1]
        %v1636 = vlaneseq
        %v1637 = vshrl.u32 %v1636, 7
        %v1638 = vsub.s32 0, %v1637
        %v1639 = vrot.slane %v1634, %v1638
        %v1705 = vunpack.c.l.b16 %v1570
        %v1706 = vunpack.c.l.b16 %v1571
        %v1707 = vunpack.c.l.b16 %v1572
        %v1708 = vunpack.c.l.b16 %v1573
        %v1709 = vunpack.c.l.b16 %v1574
        %v1710 = vunpack.c.l.b16 %v1575
        %v1711 = vunpack.c.l.b16 %v1576
        %v1712 = vunpack.c.l.b16 %v1577
        %v1713 = vunpack.c.l.b16 %v1578
        %v1714 = vunpack.c.l.b16 %v1579
        %v1715 = vunpack.c.l.b16 %v1580
        %v1716 = vunpack.c.l.b16 %v1581
        %v1717 = vunpack.c.l.b16 %v1582
        %v1718 = vunpack.c.l.b16 %v1583
        %v1719 = vunpack.c.l.b16 %v1584
        %v1720 = vunpack.c.l.b16 %v1585
        %v1721 = vunpack.c.l.b16 %v1586
        %v1722 = vunpack.c.l.b16 %v1587
        %v1723 = vunpack.c.l.b16 %v1588
        %v1724 = vunpack.c.l.b16 %v1589
        %v1725 = vunpack.c.l.b16 %v1590
        %v1726 = vunpack.c.l.b16 %v1591
        %v1727 = vunpack.c.l.b16 %v1592
        %v1728 = vunpack.c.l.b16 %v1593
        %v1729 = vunpack.c.l.b16 %v1594
        %v1730 = vunpack.c.l.b16 %v1595
        %v1731 = vunpack.c.l.b16 %v1596
        %v1732 = vunpack.c.l.b16 %v1597
        %v1733 = vunpack.c.l.b16 %v1598
        %v1734 = vunpack.c.l.b16 %v1599
        %v1735 = vunpack.c.l.b16 %v1600
        %v1736 = vunpack.c.l.b16 %v1601
        %v1737 = vunpack.c.l.b16 %v1602
        %v1738 = vunpack.c.l.b16 %v1603
        %v1739 = vunpack.c.l.b16 %v1604
        %v1740 = vunpack.c.l.b16 %v1605
        %v1741 = vunpack.c.l.b16 %v1606
        %v1742 = vunpack.c.l.b16 %v1607
        %v1743 = vunpack.c.l.b16 %v1608
        %v1744 = vunpack.c.l.b16 %v1609
        %v1745 = vunpack.c.l.b16 %v1610
        %v1746 = vunpack.c.l.b16 %v1611
        %v1747 = vunpack.c.l.b16 %v1612
        %v1748 = vunpack.c.l.b16 %v1613
        %v1749 = vunpack.c.l.b16 %v1614
        %v1750 = vunpack.c.l.b16 %v1615
        %v1751 = vunpack.c.l.b16 %v1616
        %v1752 = vunpack.c.l.b16 %v1617
        %v1753 = vunpack.c.l.b16 %v1618
        %v1754 = vunpack.c.l.b16 %v1619
        %v1755 = vunpack.c.l.b16 %v1620
        %v1756 = vunpack.c.l.b16 %v1621
        %v1757 = vunpack.c.l.b16 %v1622
        %v1758 = vunpack.c.l.b16 %v1623
        %v1759 = vunpack.c.l.b16 %v1624
        %v1760 = vunpack.c.l.b16 %v1625
        %v1761 = vunpack.c.l.b16 %v1626
        %v1762 = vunpack.c.l.b16 %v1627
        %v1763 = vunpack.c.l.b16 %v1628
        %v1764 = vunpack.c.l.b16 %v1629
        %v1765 = vunpack.c.l.b16 %v1630
        %v1766 = vunpack.c.l.b16 %v1631
        %v1767 = vunpack.c.l.b16 %v1632
        %v1768 = vunpack.c.l.b16 %v1633
        %v1769 = vpack.c.b16 %v1706, %v1705
        %v1770 = vpack.c.b16 %v1708, %v1707
        %v1771 = vpack.c.b16 %v1710, %v1709
        %v1772 = vpack.c.b16 %v1712, %v1711
        %v1773 = vpack.c.b16 %v1714, %v1713
        %v1774 = vpack.c.b16 %v1716, %v1715
        %v1775 = vpack.c.b16 %v1718, %v1717
        %v1776 = vpack.c.b16 %v1720, %v1719
        %v1777 = vpack.c.b16 %v1722, %v1721
        %v1778 = vpack.c.b16 %v1724, %v1723
        %v1779 = vpack.c.b16 %v1726, %v1725
        %v1780 = vpack.c.b16 %v1728, %v1727
        %v1781 = vpack.c.b16 %v1730, %v1729
        %v1782 = vpack.c.b16 %v1732, %v1731
        %v1783 = vpack.c.b16 %v1734, %v1733
        %v1784 = vpack.c.b16 %v1736, %v1735
        %v1785 = vpack.c.b16 %v1738, %v1737
        %v1786 = vpack.c.b16 %v1740, %v1739
        %v1787 = vpack.c.b16 %v1742, %v1741
        %v1788 = vpack.c.b16 %v1744, %v1743
        %v1789 = vpack.c.b16 %v1746, %v1745
        %v1790 = vpack.c.b16 %v1748, %v1747
        %v1791 = vpack.c.b16 %v1750, %v1749
        %v1792 = vpack.c.b16 %v1752, %v1751
        %v1793 = vpack.c.b16 %v1754, %v1753
        %v1794 = vpack.c.b16 %v1756, %v1755
        %v1795 = vpack.c.b16 %v1758, %v1757
        %v1796 = vpack.c.b16 %v1760, %v1759
        %v1797 = vpack.c.b16 %v1762, %v1761
        %v1798 = vpack.c.b16 %v1764, %v1763
        %v1799 = vpack.c.b16 %v1766, %v1765
        %v1800 = vpack.c.b16 %v1768, %v1767
        %1833 = vmatprep.subr.bf16.mxu0 0
        %1834 = vmatpush1.bf16.msra.mxu0 %v1776
        %1835 = vmatprep.subr.bf16.mxu0 0
        %1836 = vmatpush1.bf16.msra.mxu0 %v1775
        %1837 = vmatprep.subr.bf16.mxu0 0
        %1838 = vmatpush1.bf16.msra.mxu0 %v1774
        %1839 = vmatprep.subr.bf16.mxu0 0
        %1840 = vmatpush1.bf16.msra.mxu0 %v1773
        %1841 = vmatprep.subr.bf16.mxu0 0
        %1842 = vmatpush1.bf16.msra.mxu0 %v1772
        %1843 = vmatprep.subr.bf16.mxu0 0
        %1844 = vmatpush1.bf16.msra.mxu0 %v1771
        %1845 = vmatprep.subr.bf16.mxu0 0
        %1846 = vmatpush1.bf16.msra.mxu0 %v1770
        %1847 = vmatprep.subr.bf16.mxu0 0
        %1848 = vmatpush1.bf16.msra.mxu0 %v1769
        %1849 = vmatprep.subr.bf16.mxu0 0
        %1850 = vmatpush2.bf16.msra.mxu0 %v1784
        %1851 = vmatprep.subr.bf16.mxu0 0
        %1852 = vmatpush2.bf16.msra.mxu0 %v1783
        %1853 = vmatprep.subr.bf16.mxu0 0
        %1854 = vmatpush2.bf16.msra.mxu0 %v1782
        %1855 = vmatprep.subr.bf16.mxu0 0
        %1856 = vmatpush2.bf16.msra.mxu0 %v1781
        %1857 = vmatprep.subr.bf16.mxu0 0
        %1858 = vmatpush2.bf16.msra.mxu0 %v1780
        %1859 = vmatprep.subr.bf16.mxu0 0
        %1860 = vmatpush2.bf16.msra.mxu0 %v1779
        %1861 = vmatprep.subr.bf16.mxu0 0
        %1862 = vmatpush2.bf16.msra.mxu0 %v1778
        %1863 = vmatprep.subr.bf16.mxu0 0
        %1864 = vmatpush2.bf16.msra.mxu0 %v1777
        %1865 = vmatprep.mubr.bf16.mxu0 %v1567
        %1866 = vmatmul.mubr.bf16.gmra.mxu0 %v1566
        %v1867 = vpop.f32.mrf.mxu0
        %v1868 = vadd.f32 %v1639, %v1867
        %v1869 = vpop.f32.mrf.mxu0
        %v1870 = vpop.f32.mrf.mxu0
        %v1871 = vpop.f32.mrf.mxu0
        %1872 = vdwg.mxu0
        %1873 = vmatprep.subr.bf16.mxu0 0
        %1874 = vmatpush1.bf16.msra.mxu0 %v1792
        %1875 = vmatprep.subr.bf16.mxu0 0
        %1876 = vmatpush1.bf16.msra.mxu0 %v1791
        %1877 = vmatprep.subr.bf16.mxu0 0
        %1878 = vmatpush1.bf16.msra.mxu0 %v1790
        %1879 = vmatprep.subr.bf16.mxu0 0
        %1880 = vmatpush1.bf16.msra.mxu0 %v1789
        %1881 = vmatprep.subr.bf16.mxu0 0
        %1882 = vmatpush1.bf16.msra.mxu0 %v1788
        %1883 = vmatprep.subr.bf16.mxu0 0
        %1884 = vmatpush1.bf16.msra.mxu0 %v1787
        %1885 = vmatprep.subr.bf16.mxu0 0
        %1886 = vmatpush1.bf16.msra.mxu0 %v1786
        %1887 = vmatprep.subr.bf16.mxu0 0
        %1888 = vmatpush1.bf16.msra.mxu0 %v1785
        %1889 = vmatprep.subr.bf16.mxu0 0
        %1890 = vmatpush2.bf16.msra.mxu0 %v1800
        %1891 = vmatprep.subr.bf16.mxu0 0
        %1892 = vmatpush2.bf16.msra.mxu0 %v1799
        %1893 = vmatprep.subr.bf16.mxu0 0
        %1894 = vmatpush2.bf16.msra.mxu0 %v1798
        %1895 = vmatprep.subr.bf16.mxu0 0
        %1896 = vmatpush2.bf16.msra.mxu0 %v1797
        %1897 = vmatprep.subr.bf16.mxu0 0
        %1898 = vmatpush2.bf16.msra.mxu0 %v1796
        %1899 = vmatprep.subr.bf16.mxu0 0
        %1900 = vmatpush2.bf16.msra.mxu0 %v1795
        %1901 = vmatprep.subr.bf16.mxu0 0
        %1902 = vmatpush2.bf16.msra.mxu0 %v1794
        %1903 = vmatprep.subr.bf16.mxu0 0
        %1904 = vmatpush2.bf16.msra.mxu0 %v1793
        %1905 = vmatprep.mubr.bf16.mxu0 %v1569
        %1906 = vmatmul.mubr.bf16.gmra.mxu0 %v1568
        %v1907 = vpop.f32.mrf.mxu0
        %v1908 = vadd.f32 %v1868, %v1907
        %v1909 = vpop.f32.mrf.mxu0
        %v1910 = vpop.f32.mrf.mxu0
        %v1911 = vpop.f32.mrf.mxu0
        %1912 = vdwg.mxu0
        %v1913 = vadd.f32 %v1209, %v1908
        %v1914 = vadd.f32 %v1913, %v579
        %v1915 = vrot.slane %v1914, 4
        %v1916 = vadd.f32 %v1914, %v1915
        %v1917 = vrot.slane %v1916, 2
        %v1918 = vadd.f32 %v1916, %v1917
        %v1919 = vrot.slane %v1918, 1
        %v1920 = vadd.f32 %v1918, %v1919
        %v1921 = vrcp.pop 8.0
        %v1922 = vmul.f32 %v1920, %v1921
        %1923 = vst [vmem:[%s577] sm:$0x1] %v1922
        %s1924 = sand.u32 %s342, 1
        %s1925 = scalar_lea.sflag [#allocation4], %s1924
        %s1926 = sand.u32 %s342, 1
        %s1927 = scalar_lea.vmem [#allocation16], %s1926
        // Predicated region
        $region109: #{tpu_custom_call.1} parent=75 // pred_check
          %p1928 = pneg %p352
        $region110: #{tpu_custom_call.1} parent=75 // pred_check_branch
          %1930 = sbr.rel (%p1928) target = $region112
        $region111: #{tpu_custom_call.1} parent=75 // pred_region
          %s1932 = ssub.s32 16, 16
          %1933 = vsyncadd %s1925, %s1932
          %s1934 = smul.addr %s35, 16
          %s1935 = scalar_lea.hbm %s14, %s1934
          %s1937 = sshll.u32 %s1927, 4
          %s1938 = int_to_ptr.vmem [resolvable:$true] %s1937
          %1940 = dma.vmem_to_hbm [thread:$0]  %s1938, 16, %s1935, %s1925
        $region112: #{tpu_custom_call.1} parent=75 // pred_fallthru
          _
      $region76: #{tpu_custom_call.1} parent=5 // pred_fallthru
        _
      %p1941 = scmp.le.s32.totalorder 2, %s30
      // Predicated region
      $region113: #{tpu_custom_call.1} parent=5 // pred_check
        %p1942 = pneg %p1941
      $region114: #{tpu_custom_call.1} parent=5 // pred_check_branch
        %1944 = sbr.rel (%p1942) target = $region116
      $region115: #{tpu_custom_call.1} parent=5 // pred_region
        %s1945 = ssub.s32 %s30, 2
        // Predicated region
        $region117: #{tpu_custom_call.1} parent=115 // pred_check
          %p1946 = pneg %p358
        $region118: #{tpu_custom_call.1} parent=115 // pred_check_branch
          %1948 = sbr.rel (%p1946) target = $region120
        $region119: #{tpu_custom_call.1} parent=115 // pred_region
          %s1949 = sand.u32 %s343, 1
          %s1950 = scalar_lea.sflag [#allocation4], %s1949
          %s1951 = sand.u32 %s343, 1
          %s1952 = scalar_lea.vmem [#allocation16], %s1951
          %1953 = dma.done %s1950, 16
        $region120: #{tpu_custom_call.1} parent=115 // pred_fallthru
          _
      $region116: #{tpu_custom_call.1} parent=5 // pred_fallthru
        _
    $region6: #{tpu_custom_call.1} parent=1 // loop_footer
      %s34 = sadd.s32 1, %s30
    $region7: #{tpu_custom_call.1} parent=1 // loop_footer_branch
      %29 = sbr.rel target = $region3
    $region8: #{tpu_custom_call.1} parent=1 // loop_exit
      _
    %1954 = vsyncpa [#allocation3], 1
    %s1955 = scalar_lea.sflag [#allocation3], 1
    %1956 = vsyncpa %s1955, 1
    %1957 = vsyncpa [#allocation6], 1
    %1958 = vsyncpa [#allocation9], 1
    %1959 = vsyncpa [#allocation12], 1
    %1960 = vsyncpa [#allocation15], 1
    %1961 = vsyncpa [#allocation4], 1
    %s1962 = scalar_lea.sflag [#allocation4], 1
    %1963 = vsyncpa %s1962, 1

</llo_original>
